<compile_context>
chip_gen: v7x
topology: tpu7x:2x2x1
jax: 0.10.0
libtpu: 0.0.40
codegen_flags: <defaults>
</compile_context>

<pallas_src>
import math
import jax
import jax.numpy as jnp
from jax import lax
from jax.experimental import pallas as pl
from jax.experimental.pallas import tpu as pltpu

POOL_KERNEL = 75
POOL_STRIDE = 30
LN_EPS = 1e-5
ATTN_SCALE = 1.0 / math.sqrt(int(1000 / 30))  # 1/sqrt(33), as in the module
_NEG_BIG = -1e30


def _channel_attn_kernel(x_ref, pool_ref, mavg_ref, wqk_ref, bqk_ref,
                         wv_ref, bv_ref, wo_ref, bo_ref, mask_ref, o_ref):
    # x_ref   : (1, T, PC)   `pack` (b,g) slices packed along lanes, PC = pack*C
    # pool_ref: (Tp, T)      AvgPool2d(75,30) as a matmul (rows sum to 1)
    # mavg_ref: (PC, PC)     1/C inside each CxC diagonal block (per-slice mean)
    # wqk_ref : (PC, 2*PC)   [blockdiag(W'_q) | blockdiag(W'_k)]  (gamma folded)
    # bqk_ref : (1, 2*PC)    [b'_q tiled | b'_k tiled]
    # wv/wo   : (PC, PC)     blockdiag(W'_v) / blockdiag(W'_o)
    # bv/bo   : (1, PC)
    # mask_ref: (PC, PC)     0 inside each slice's CxC block, -1e30 elsewhere
    x = x_ref[0].astype(jnp.float32)                         # (T, PC)
    m_avg = mavg_ref[...]
    pc = x.shape[-1]

    def layer_norm(z):
        # per-slice (per 32-lane block) LN stats via block-averaging matmuls
        mu = jnp.dot(z, m_avg, preferred_element_type=jnp.float32)
        zc = z - mu
        var = jnp.dot(zc * zc, m_avg, preferred_element_type=jnp.float32)
        return zc * lax.rsqrt(var + LN_EPS)

    xn = layer_norm(x)                                       # stats computed once

    # Pool first (exact: pool rows sum to 1, so pooling commutes with affine).
    xn_pooled = jnp.dot(pool_ref[...], xn,
                        preferred_element_type=jnp.float32)  # (Tp, PC)
    qk = jnp.dot(xn_pooled, wqk_ref[...],
                 preferred_element_type=jnp.float32) + bqk_ref[...]   # (Tp, 2*PC)
    q = qk[:, :pc]                                           # (Tp, PC)
    k = qk[:, pc:]                                           # (Tp, PC)

    v = jnp.dot(xn, wv_ref[...],
                preferred_element_type=jnp.float32) + bv_ref[...]     # (T, PC)

    # scores[i, j] = sum_t q[t, i] * k[t, j]; only same-slice blocks are valid.
    s = lax.dot_general(q, k, (((0,), (0,)), ((), ())),
                        preferred_element_type=jnp.float32) * ATTN_SCALE
    s = s + mask_ref[...]
    s = s - jnp.max(s, axis=-1, keepdims=True)
    e = jnp.exp(s)
    attn = e * pl.reciprocal(jnp.sum(e, axis=-1, keepdims=True),
                             approx=False)                   # (PC, PC), block-diag

    # out[t, i] = sum_j attn[i, j] * v[t, j]  (attn off-diagonal blocks are 0)
    out_tc = lax.dot_general(v, attn, (((1,), (1,)), ((), ())),
                             preferred_element_type=jnp.float32)      # (T, PC)

    out = jnp.dot(layer_norm(out_tc), wo_ref[...],
                  preferred_element_type=jnp.float32) + bo_ref[...]
    o_ref[0] = out.astype(o_ref.dtype)


def _choose_pack(bg, c):
    """Pack slices along lanes, but keep >=2 grid programs when possible (v7x)."""
    max_pack = max(1, 128 // c)
    if bg >= 2 * max_pack:
        return max_pack
    return max(1, min(max_pack, (bg + 1) // 2))


def prepare_params(gamma, beta, w, b, *, channel_size, seq_len, pack):
    """One-time prep: fold LN affine into the Linears, build block-diagonal
    packed weights, pooling matrix, block-mean matrix and softmax block mask."""
    C, T = channel_size, seq_len
    g = gamma[:, 0, :].astype(jnp.float32)                   # (4, C)
    be = beta[:, 0, :].astype(jnp.float32)
    bb = b[:, 0, :].astype(jnp.float32)
    w32 = w.astype(jnp.float32)
    wf = g[:, :, None] * w32                                 # diag(g) @ W   (4, C, C)
    bf = jnp.einsum('ic,icd->id', be, w32) + bb              # beta @ W + b  (4, C)

    eye = jnp.eye(pack, dtype=jnp.float32)
    bd = lambda m: jnp.kron(eye, m)                          # (C,Co) -> (pack*C, pack*Co)
    wqk = jnp.concatenate([bd(wf[0]), bd(wf[1])], axis=1)    # (PC, 2*PC)
    bqk = jnp.concatenate([jnp.tile(bf[0], pack),
                           jnp.tile(bf[1], pack)])[None, :]  # (1, 2*PC)
    wv, bv = bd(wf[2]), jnp.tile(bf[2], pack)[None, :]
    wo, bo = bd(wf[3]), jnp.tile(bf[3], pack)[None, :]

    m_avg = bd(jnp.full((C, C), 1.0 / C, dtype=jnp.float32))  # per-slice mean matrix
    blk = jnp.arange(pack * C) // C
    mask = jnp.where(blk[:, None] == blk[None, :], 0.0, _NEG_BIG).astype(jnp.float32)

    Tp = (T - POOL_KERNEL) // POOL_STRIDE + 1
    assert Tp >= 1, "time dim must be >= 75 for the fixed AvgPool2d"
    t_idx = jnp.arange(T)[None, :]
    start = (jnp.arange(Tp) * POOL_STRIDE)[:, None]
    pool = (((t_idx >= start) & (t_idx < start + POOL_KERNEL))
            .astype(jnp.float32) / float(POOL_KERNEL))        # (Tp, T)
    return pool, m_avg, wqk, bqk, wv, bv, wo, bo, mask


@jax.jit
def channel_attention(x, pool, m_avg, wqk, bqk, wv, bv, wo, bo, mask):
    """x: (B, G, C, T) float32.  Returns (B, G, C, T), like the PyTorch module."""
    B, G, C, T = x.shape
    PC = m_avg.shape[0]
    pack = PC // C
    Tp = pool.shape[0]
    bg = B * G
    n_groups = pl.cdiv(bg, pack)
    padded = n_groups * pack

    # glue: time-major, then pack `pack` slices along the lane axis
    x_tc = jnp.transpose(x, (0, 1, 3, 2)).reshape(bg, T, C)
    if padded != bg:
        x_tc = jnp.concatenate(
            [x_tc, jnp.zeros((padded - bg, T, C), x_tc.dtype)], axis=0)
    x_packed = (x_tc.reshape(n_groups, pack, T, C)
                .transpose(0, 2, 1, 3).reshape(n_groups, T, PC))

    out_packed = pl.pallas_call(
        _channel_attn_kernel,
        out_shape=jax.ShapeDtypeStruct((n_groups, T, PC), x.dtype),
        grid=(n_groups,),
        in_specs=[
            pl.BlockSpec((1, T, PC), lambda i: (i, 0, 0)),   # x (packed)
            pl.BlockSpec((Tp, T), lambda i: (0, 0)),         # pool
            pl.BlockSpec((PC, PC), lambda i: (0, 0)),        # block-mean matrix
            pl.BlockSpec((PC, 2 * PC), lambda i: (0, 0)),    # W_qk (block-diag)
            pl.BlockSpec((1, 2 * PC), lambda i: (0, 0)),     # b_qk
            pl.BlockSpec((PC, PC), lambda i: (0, 0)),        # W_v
            pl.BlockSpec((1, PC), lambda i: (0, 0)),         # b_v
            pl.BlockSpec((PC, PC), lambda i: (0, 0)),        # W_o
            pl.BlockSpec((1, PC), lambda i: (0, 0)),         # b_o
            pl.BlockSpec((PC, PC), lambda i: (0, 0)),        # softmax block mask
        ],
        out_specs=pl.BlockSpec((1, T, PC), lambda i: (i, 0, 0)),
        compiler_params=pltpu.CompilerParams(dimension_semantics=("parallel",)),
    )(x_packed, pool, m_avg, wqk, bqk, wv, bv, wo, bo, mask)

    # glue: unpack lanes, drop padding, back to (B, G, C, T)
    out_tc = (out_packed.reshape(n_groups, T, pack, C)
              .transpose(0, 2, 1, 3).reshape(padded, T, C)[:bg])
    return jnp.transpose(out_tc.reshape(B, G, T, C), (0, 1, 3, 2))


def _reference(x, gamma, beta, w, b):
    """Pure-JAX reference mirroring the PyTorch forward (eval mode)."""
    B, G, C, T = x.shape
    Tp = (T - POOL_KERNEL) // POOL_STRIDE + 1
    xp = jnp.swapaxes(x, -1, -2)  # (B, G, T, C)

    def ln_lin(i, inp):
        mu = jnp.mean(inp, -1, keepdims=True)
        var = jnp.mean((inp - mu) ** 2, -1, keepdims=True)
        xn = (inp - mu) / jnp.sqrt(var + LN_EPS)
        return (xn * gamma[i, 0] + beta[i, 0]) @ w[i] + b[i, 0]

    t_idx = jnp.arange(T)[None, :]
    start = (jnp.arange(Tp) * POOL_STRIDE)[:, None]
    pool = ((t_idx >= start) & (t_idx < start + POOL_KERNEL)).astype(jnp.float32)
    pool = pool / float(POOL_KERNEL)

    q = jnp.einsum('pt,bgtc->bgpc', pool, ln_lin(0, xp))
    k = jnp.einsum('pt,bgtc->bgpc', pool, ln_lin(1, xp))
    v = ln_lin(2, xp)
    scores = jnp.einsum('bgti,bgtj->bgij', q, k) * ATTN_SCALE
    attn = jax.nn.softmax(scores, axis=-1)
    out_tc = jnp.einsum('bgtj,bgij->bgti', v, attn)
    out = ln_lin(3, out_tc)
    return jnp.swapaxes(out, -1, -2)


if __name__ == "__main__":
    B, G, C, T = 2, 2, 32, 135  # channel_size = 32; T >= 75 required by AvgPool2d

    key = jax.random.PRNGKey(0)
    kx, kw, kb, kg, kbe = jax.random.split(key, 5)

    x = jax.random.normal(kx, (B, G, C, T), dtype=jnp.float32)
    # Parameter shapes from __init__: 4x (LayerNorm(C) + Linear(C, C)) for q/k/v/o.
    # Deterministic synthetic init (not replicating the module's zero-weight quirk).
    w = jax.random.normal(kw, (4, C, C), dtype=jnp.float32) * (1.0 / math.sqrt(C))
    b = jax.random.normal(kb, (4, 1, C), dtype=jnp.float32) * 0.01
    gamma = 1.0 + 0.1 * jax.random.normal(kg, (4, 1, C), dtype=jnp.float32)
    beta = 0.1 * jax.random.normal(kbe, (4, 1, C), dtype=jnp.float32)

    # Hoisted one-time param prep (pool matrix, gamma folding, block-diag pack).
    pack = _choose_pack(B * G, C)  # -> 2 here: 64-lane blocks, grid=(2,) for v7x
    params = prepare_params(gamma, beta, w, b,
                            channel_size=C, seq_len=T, pack=pack)

    out = jax.block_until_ready(channel_attention(x, *params))
    ref = jax.block_until_ready(_reference(x, gamma, beta, w, b))

    assert out.shape == (B, G, C, T)
    assert jnp.allclose(out, ref, rtol=1e-4, atol=1e-4), (
        float(jnp.max(jnp.abs(out - ref))))

    print("KERNEL_OK")
</pallas_src>

<mosaic_0001>
module attributes {stable_mosaic.version = 11 : i64} {
  func.func @_channel_attn_kernel(%arg0: i32, %arg1: memref<1x135x64xf32, #tpu.memory_space<vmem>>, %arg2: memref<3x135xf32, #tpu.memory_space<vmem>>, %arg3: memref<64x64xf32, #tpu.memory_space<vmem>>, %arg4: memref<64x128xf32, #tpu.memory_space<vmem>>, %arg5: memref<1x128xf32, #tpu.memory_space<vmem>>, %arg6: memref<64x64xf32, #tpu.memory_space<vmem>>, %arg7: memref<1x64xf32, #tpu.memory_space<vmem>>, %arg8: memref<64x64xf32, #tpu.memory_space<vmem>>, %arg9: memref<1x64xf32, #tpu.memory_space<vmem>>, %arg10: memref<64x64xf32, #tpu.memory_space<vmem>>, %arg11: memref<1x135x64xf32, #tpu.memory_space<vmem>>) attributes {dimension_semantics = [#tpu.dimension_semantics<parallel>], iteration_bounds = array<i64: 2>, scalar_prefetch = 0 : i64, scratch_operands = 0 : i64, tpu.core_type = #tpu.core_type<tc>, window_params = [{transform_indices = @transform_0, window_bounds = array<i64: 1, 135, 64>}, {pipeline_mode = #tpu.pipeline_mode<synchronous>, transform_indices = @transform_1, window_bounds = array<i64: 3, 135>}, {pipeline_mode = #tpu.pipeline_mode<synchronous>, transform_indices = @transform_2, window_bounds = array<i64: 64, 64>}, {pipeline_mode = #tpu.pipeline_mode<synchronous>, transform_indices = @transform_3, window_bounds = array<i64: 64, 128>}, {pipeline_mode = #tpu.pipeline_mode<synchronous>, transform_indices = @transform_4, window_bounds = array<i64: 1, 128>}, {pipeline_mode = #tpu.pipeline_mode<synchronous>, transform_indices = @transform_5, window_bounds = array<i64: 64, 64>}, {pipeline_mode = #tpu.pipeline_mode<synchronous>, transform_indices = @transform_6, window_bounds = array<i64: 1, 64>}, {pipeline_mode = #tpu.pipeline_mode<synchronous>, transform_indices = @transform_7, window_bounds = array<i64: 64, 64>}, {pipeline_mode = #tpu.pipeline_mode<synchronous>, transform_indices = @transform_8, window_bounds = array<i64: 1, 64>}, {pipeline_mode = #tpu.pipeline_mode<synchronous>, transform_indices = @transform_9, window_bounds = array<i64: 64, 64>}, {transform_indices = @transform_10, window_bounds = array<i64: 1, 135, 64>}]} {
    %c0 = arith.constant 0 : index
    %c0_0 = arith.constant 0 : index
    %c0_1 = arith.constant 0 : index
    %0 = vector.load %arg1[%c0, %c0_0, %c0_1] : memref<1x135x64xf32, #tpu.memory_space<vmem>>, vector<1x135x64xf32>
    %1 = vector.shape_cast %0 : vector<1x135x64xf32> to vector<135x64xf32>
    %c0_2 = arith.constant 0 : index
    %c0_3 = arith.constant 0 : index
    %2 = vector.load %arg3[%c0_2, %c0_3] : memref<64x64xf32, #tpu.memory_space<vmem>>, vector<64x64xf32>
    %cst = arith.constant dense<0.000000e+00> : vector<135x64xf32>
    %3 = tpu.matmul %1, %2, %cst {dimension_numbers = #tpu.dot_dimension_numbers<[1], [0], [0], [1], [0, 0, 1, 1], [], []>} : vector<135x64xf32>, vector<64x64xf32>, vector<135x64xf32> -> vector<135x64xf32>
    %4 = arith.subf %1, %3 : vector<135x64xf32>
    %5 = arith.mulf %4, %4 : vector<135x64xf32>
    %cst_4 = arith.constant dense<0.000000e+00> : vector<135x64xf32>
    %6 = tpu.matmul %5, %2, %cst_4 {dimension_numbers = #tpu.dot_dimension_numbers<[1], [0], [0], [1], [0, 0, 1, 1], [], []>} : vector<135x64xf32>, vector<64x64xf32>, vector<135x64xf32> -> vector<135x64xf32>
    %cst_5 = arith.constant 9.99999974E-6 : f32
    %7 = vector.broadcast %cst_5 : f32 to vector<135x64xf32>
    %8 = arith.addf %6, %7 : vector<135x64xf32>
    %9 = math.rsqrt %8 : vector<135x64xf32>
    %10 = arith.mulf %4, %9 : vector<135x64xf32>
    %c0_6 = arith.constant 0 : index
    %c0_7 = arith.constant 0 : index
    %11 = vector.load %arg2[%c0_6, %c0_7] : memref<3x135xf32, #tpu.memory_space<vmem>>, vector<3x135xf32>
    %cst_8 = arith.constant dense<0.000000e+00> : vector<3x64xf32>
    %12 = tpu.matmul %11, %10, %cst_8 {dimension_numbers = #tpu.dot_dimension_numbers<[1], [0], [0], [1], [0, 0, 1, 1], [], []>} : vector<3x135xf32>, vector<135x64xf32>, vector<3x64xf32> -> vector<3x64xf32>
    %c0_9 = arith.constant 0 : index
    %c0_10 = arith.constant 0 : index
    %13 = vector.load %arg4[%c0_9, %c0_10] : memref<64x128xf32, #tpu.memory_space<vmem>>, vector<64x128xf32>
    %cst_11 = arith.constant dense<0.000000e+00> : vector<3x128xf32>
    %14 = tpu.matmul %12, %13, %cst_11 {dimension_numbers = #tpu.dot_dimension_numbers<[1], [0], [0], [1], [0, 0, 1, 1], [], []>} : vector<3x64xf32>, vector<64x128xf32>, vector<3x128xf32> -> vector<3x128xf32>
    %c0_12 = arith.constant 0 : index
    %c0_13 = arith.constant 0 : index
    %15 = vector.load %arg5[%c0_12, %c0_13] : memref<1x128xf32, #tpu.memory_space<vmem>>, vector<1x128xf32>
    %16 = vector.broadcast %15 : vector<1x128xf32> to vector<3x128xf32>
    %17 = arith.addf %14, %16 : vector<3x128xf32>
    %18 = vector.extract_strided_slice %17 {offsets = [0, 0], sizes = [3, 64], strides = [1, 1]} : vector<3x128xf32> to vector<3x64xf32>
    %19 = vector.extract_strided_slice %17 {offsets = [0, 64], sizes = [3, 64], strides = [1, 1]} : vector<3x128xf32> to vector<3x64xf32>
    %c0_14 = arith.constant 0 : index
    %c0_15 = arith.constant 0 : index
    %20 = vector.load %arg6[%c0_14, %c0_15] : memref<64x64xf32, #tpu.memory_space<vmem>>, vector<64x64xf32>
    %cst_16 = arith.constant dense<0.000000e+00> : vector<135x64xf32>
    %21 = tpu.matmul %10, %20, %cst_16 {dimension_numbers = #tpu.dot_dimension_numbers<[1], [0], [0], [1], [0, 0, 1, 1], [], []>} : vector<135x64xf32>, vector<64x64xf32>, vector<135x64xf32> -> vector<135x64xf32>
    %c0_17 = arith.constant 0 : index
    %c0_18 = arith.constant 0 : index
    %22 = vector.load %arg7[%c0_17, %c0_18] : memref<1x64xf32, #tpu.memory_space<vmem>>, vector<1x64xf32>
    %23 = vector.broadcast %22 : vector<1x64xf32> to vector<135x64xf32>
    %24 = arith.addf %21, %23 : vector<135x64xf32>
    %cst_19 = arith.constant dense<0.000000e+00> : vector<64x64xf32>
    %25 = tpu.matmul %18, %19, %cst_19 {dimension_numbers = #tpu.dot_dimension_numbers<[0], [0], [1], [1], [0, 1, 1, 1], [], []>} : vector<3x64xf32>, vector<3x64xf32>, vector<64x64xf32> -> vector<64x64xf32>
    %cst_20 = arith.constant 0.17407766 : f32
    %26 = vector.broadcast %cst_20 : f32 to vector<64x64xf32>
    %27 = arith.mulf %25, %26 : vector<64x64xf32>
    %c0_21 = arith.constant 0 : index
    %c0_22 = arith.constant 0 : index
    %28 = vector.load %arg10[%c0_21, %c0_22] : memref<64x64xf32, #tpu.memory_space<vmem>>, vector<64x64xf32>
    %29 = arith.addf %27, %28 : vector<64x64xf32>
    %cst_23 = arith.constant dense<0xFF800000> : vector<64xf32>
    %30 = vector.multi_reduction <maximumf>, %29, %cst_23 [1] : vector<64x64xf32> to vector<64xf32>
    %31 = vector.shape_cast %30 : vector<64xf32> to vector<64x1xf32>
    %32 = vector.broadcast %31 : vector<64x1xf32> to vector<64x64xf32>
    %33 = arith.subf %29, %32 : vector<64x64xf32>
    %34 = math.exp %33 : vector<64x64xf32>
    %cst_24 = arith.constant dense<0.000000e+00> : vector<64xf32>
    %35 = vector.multi_reduction <add>, %34, %cst_24 [1] : vector<64x64xf32> to vector<64xf32>
    %36 = vector.shape_cast %35 : vector<64xf32> to vector<64x1xf32>
    %37 = tpu.reciprocal %36 : vector<64x1xf32> -> vector<64x1xf32>
    %38 = vector.broadcast %37 : vector<64x1xf32> to vector<64x64xf32>
    %39 = arith.mulf %34, %38 : vector<64x64xf32>
    %cst_25 = arith.constant dense<0.000000e+00> : vector<135x64xf32>
    %40 = tpu.matmul %24, %39, %cst_25 {dimension_numbers = #tpu.dot_dimension_numbers<[1], [1], [0], [0], [0, 0, 1, 0], [], []>} : vector<135x64xf32>, vector<64x64xf32>, vector<135x64xf32> -> vector<135x64xf32>
    %cst_26 = arith.constant dense<0.000000e+00> : vector<135x64xf32>
    %41 = tpu.matmul %40, %2, %cst_26 {dimension_numbers = #tpu.dot_dimension_numbers<[1], [0], [0], [1], [0, 0, 1, 1], [], []>} : vector<135x64xf32>, vector<64x64xf32>, vector<135x64xf32> -> vector<135x64xf32>
    %42 = arith.subf %40, %41 : vector<135x64xf32>
    %43 = arith.mulf %42, %42 : vector<135x64xf32>
    %cst_27 = arith.constant dense<0.000000e+00> : vector<135x64xf32>
    %44 = tpu.matmul %43, %2, %cst_27 {dimension_numbers = #tpu.dot_dimension_numbers<[1], [0], [0], [1], [0, 0, 1, 1], [], []>} : vector<135x64xf32>, vector<64x64xf32>, vector<135x64xf32> -> vector<135x64xf32>
    %cst_28 = arith.constant 9.99999974E-6 : f32
    %45 = vector.broadcast %cst_28 : f32 to vector<135x64xf32>
    %46 = arith.addf %44, %45 : vector<135x64xf32>
    %47 = math.rsqrt %46 : vector<135x64xf32>
    %48 = arith.mulf %42, %47 : vector<135x64xf32>
    %c0_29 = arith.constant 0 : index
    %c0_30 = arith.constant 0 : index
    %49 = vector.load %arg8[%c0_29, %c0_30] : memref<64x64xf32, #tpu.memory_space<vmem>>, vector<64x64xf32>
    %cst_31 = arith.constant dense<0.000000e+00> : vector<135x64xf32>
    %50 = tpu.matmul %48, %49, %cst_31 {dimension_numbers = #tpu.dot_dimension_numbers<[1], [0], [0], [1], [0, 0, 1, 1], [], []>} : vector<135x64xf32>, vector<64x64xf32>, vector<135x64xf32> -> vector<135x64xf32>
    %c0_32 = arith.constant 0 : index
    %c0_33 = arith.constant 0 : index
    %51 = vector.load %arg9[%c0_32, %c0_33] : memref<1x64xf32, #tpu.memory_space<vmem>>, vector<1x64xf32>
    %52 = vector.broadcast %51 : vector<1x64xf32> to vector<135x64xf32>
    %53 = arith.addf %50, %52 : vector<135x64xf32>
    %c0_34 = arith.constant 0 : index
    %c0_35 = arith.constant 0 : index
    %c0_36 = arith.constant 0 : index
    %54 = vector.load %arg11[%c0_34, %c0_35, %c0_36] : memref<1x135x64xf32, #tpu.memory_space<vmem>>, vector<1x135x64xf32>
    %55 = vector.shape_cast %54 : vector<1x135x64xf32> to vector<135x64xf32>
    %56 = vector.shape_cast %53 : vector<135x64xf32> to vector<1x135x64xf32>
    tpu.vector_store %arg11[%c0_34, %c0_35, %c0_36], %56 {strides = array<i32>} : memref<1x135x64xf32, #tpu.memory_space<vmem>>, vector<1x135x64xf32>,
    return
  }
  func.func @transform_0(%arg0: i32) -> (i32, i32, i32) {
    %c0_i32 = arith.constant 0 : i32
    %c0_i32_0 = arith.constant 0 : i32
    %c0_i32_1 = arith.constant 0 : i32
    return %arg0, %c0_i32, %c0_i32_0 : i32, i32, i32
  }
  func.func @transform_1(%arg0: i32) -> (i32, i32) {
    %c0_i32 = arith.constant 0 : i32
    %c0_i32_0 = arith.constant 0 : i32
    %c0_i32_1 = arith.constant 0 : i32
    return %c0_i32, %c0_i32_0 : i32, i32
  }
  func.func @transform_2(%arg0: i32) -> (i32, i32) {
    %c0_i32 = arith.constant 0 : i32
    %c0_i32_0 = arith.constant 0 : i32
    %c0_i32_1 = arith.constant 0 : i32
    return %c0_i32, %c0_i32_0 : i32, i32
  }
  func.func @transform_3(%arg0: i32) -> (i32, i32) {
    %c0_i32 = arith.constant 0 : i32
    %c0_i32_0 = arith.constant 0 : i32
    %c0_i32_1 = arith.constant 0 : i32
    return %c0_i32, %c0_i32_0 : i32, i32
  }
  func.func @transform_4(%arg0: i32) -> (i32, i32) {
    %c0_i32 = arith.constant 0 : i32
    %c0_i32_0 = arith.constant 0 : i32
    %c0_i32_1 = arith.constant 0 : i32
    return %c0_i32, %c0_i32_0 : i32, i32
  }
  func.func @transform_5(%arg0: i32) -> (i32, i32) {
    %c0_i32 = arith.constant 0 : i32
    %c0_i32_0 = arith.constant 0 : i32
    %c0_i32_1 = arith.constant 0 : i32
    return %c0_i32, %c0_i32_0 : i32, i32
  }
  func.func @transform_6(%arg0: i32) -> (i32, i32) {
    %c0_i32 = arith.constant 0 : i32
    %c0_i32_0 = arith.constant 0 : i32
    %c0_i32_1 = arith.constant 0 : i32
    return %c0_i32, %c0_i32_0 : i32, i32
  }
  func.func @transform_7(%arg0: i32) -> (i32, i32) {
    %c0_i32 = arith.constant 0 : i32
    %c0_i32_0 = arith.constant 0 : i32
    %c0_i32_1 = arith.constant 0 : i32
    return %c0_i32, %c0_i32_0 : i32, i32
  }
  func.func @transform_8(%arg0: i32) -> (i32, i32) {
    %c0_i32 = arith.constant 0 : i32
    %c0_i32_0 = arith.constant 0 : i32
    %c0_i32_1 = arith.constant 0 : i32
    return %c0_i32, %c0_i32_0 : i32, i32
  }
  func.func @transform_9(%arg0: i32) -> (i32, i32) {
    %c0_i32 = arith.constant 0 : i32
    %c0_i32_0 = arith.constant 0 : i32
    %c0_i32_1 = arith.constant 0 : i32
    return %c0_i32, %c0_i32_0 : i32, i32
  }
  func.func @transform_10(%arg0: i32) -> (i32, i32, i32) {
    %c0_i32 = arith.constant 0 : i32
    %c0_i32_0 = arith.constant 0 : i32
    %c0_i32_1 = arith.constant 0 : i32
    return %arg0, %c0_i32, %c0_i32_0 : i32, i32, i32
  }
}

</mosaic_0001>

<llo_original>
// kernel: channel_attention.1
$region0: #{channel_attention.1}
  #allocation0 [shape = 'u32[]', space=smem, size = 0x4, offset = 0x4, fixed_abs, tag = 'smem constant byte address 0x4 - core index']
  #allocation1 [shape = 'u32[144,128]{1,0:T(1,128)}', space=vmem, size = 0x12000, scoped, tag = 'internal scratch']
  %s0 = inlined_call_operand.vmem [shape: f32[2,135,64], index: 0, kind: input, shape index: {}]
  %s1 = inlined_call_operand.vmem [shape: f32[3,135], index: 1, kind: input, shape index: {}]
  %s2 = inlined_call_operand.vmem [shape: f32[64,64], index: 2, kind: input, shape index: {}]
  %s3 = inlined_call_operand.vmem [shape: f32[64,128], index: 3, kind: input, shape index: {}]
  %s4 = inlined_call_operand.vmem [shape: f32[1,128], index: 4, kind: input, shape index: {}]
  %s5 = inlined_call_operand.vmem [shape: f32[64,64], index: 5, kind: input, shape index: {}]
  %s6 = inlined_call_operand.vmem [shape: f32[1,64], index: 6, kind: input, shape index: {}]
  %s7 = inlined_call_operand.vmem [shape: f32[64,64], index: 7, kind: input, shape index: {}]
  %s8 = inlined_call_operand.vmem [shape: f32[1,64], index: 8, kind: input, shape index: {}]
  %s9 = inlined_call_operand.vmem [shape: f32[64,64], index: 9, kind: input, shape index: {}]
  %s10 = inlined_call_operand.vmem [shape: f32[2,135,64], index: 10, kind: output, shape index: {}]
  %s11 = sld [smem:[#allocation0]]
  $region73: #{channel_attention.1} parent=0
    _
  %s13 = ssub.s32 1, %s11
  %s14 = scalar_select 0, %s13, %s11
  loop: start=0, step=1, limit=4
  $region2: #{channel_attention.1} parent=0 // loop_pre_header
    _
  $region3: #{channel_attention.1} parent=0 // loop_header
    %s16 = sphi 0, %s20
    %p17 = scmp.ge.s32.totalorder %s16, 4
    %s26 = sphi 0, %s28
    %s29 = sphi 0, %s26
    %s30 = sphi 0, %s29
    %s46 = sphi 0, %s30
    %s50 = sphi 0, %s50
    %s52 = sphi 0, %s50
    %s53 = sphi 0, %s52
    %s67 = sphi 0, %s53
    %s71 = sphi 0, %s71
    %s73 = sphi 0, %s71
    %s74 = sphi 0, %s73
    %s88 = sphi 0, %s74
    %s92 = sphi 0, %s92
    %s94 = sphi 0, %s92
    %s95 = sphi 0, %s94
    %s109 = sphi 0, %s95
    %s113 = sphi 0, %s113
    %s115 = sphi 0, %s113
    %s116 = sphi 0, %s115
    %s130 = sphi 0, %s116
    %s134 = sphi 0, %s134
    %s136 = sphi 0, %s134
    %s137 = sphi 0, %s136
    %s151 = sphi 0, %s137
    %s155 = sphi 0, %s155
    %s157 = sphi 0, %s155
    %s158 = sphi 0, %s157
    %s172 = sphi 0, %s158
    %s176 = sphi 0, %s176
    %s178 = sphi 0, %s176
    %s179 = sphi 0, %s178
    %s193 = sphi 0, %s179
    %s197 = sphi 0, %s197
    %s199 = sphi 0, %s197
    %s200 = sphi 0, %s199
    %s214 = sphi 0, %s200
    %s218 = sphi 0, %s218
    %s220 = sphi 0, %s218
    %s221 = sphi 0, %s220
    %s235 = sphi 0, %s221
    %s241 = sphi 0, %s243
    %s244 = sphi 0, %s241
    %s245 = sphi 0, %s244
    %s261 = sphi 0, %s245
  $region4: #{channel_attention.1} parent=0 // loop_header_branch
    %19 = sbr.rel (%p17) target = $region8
  $region5: #{channel_attention.1} parent=0 // loop_body
    %s21 = ssub.s32 %s16, 1
    %s22 = ssub.s32 %s16, 2
    %s23 = sadd.s32 %s16, 1
    %s24 = ssub.s32 %s16, %s23
    %p25 = scmp.eq.s32.totalorder %s24, 0
    %s27 = sadd.s32 %s26, 1
    %s28 = scalar_select %p25, %s26, %s27
    %p31 = pneg %p25
    %p32 = scmp.eq.s32.totalorder %s16, 1
    %p33 = por %p31, %p32
    %p34 = scmp.ne.s32.totalorder %s26, %s29
    %p35 = scmp.eq.s32.totalorder %s16, 0
    %p36 = por %p34, %p35
    %p37 = scmp.ne.s32.totalorder %s26, %s29
    %p38 = scmp.eq.s32.totalorder %s21, 1
    %p39 = por %p37, %p38
    %p40 = scmp.ne.s32.totalorder %s29, %s30
    %p41 = scmp.eq.s32.totalorder %s21, 0
    %p42 = por %p40, %p41
    %p43 = scmp.ne.s32.totalorder %s29, %s30
    %p44 = scmp.eq.s32.totalorder %s22, 1
    %p45 = por %p43, %p44
    %p47 = scmp.ne.s32.totalorder %s30, %s46
    %p48 = scmp.eq.s32.totalorder %s22, 0
    %p49 = por %p47, %p48
    %s51 = sadd.s32 %s50, 1
    %p54 = scmp.eq.s32.totalorder %s16, 1
    %p55 = scmp.ne.s32.totalorder %s50, %s52
    %p56 = scmp.eq.s32.totalorder %s16, 0
    %p57 = por %p55, %p56
    %p58 = scmp.ne.s32.totalorder %s50, %s52
    %p59 = scmp.eq.s32.totalorder %s21, 1
    %p60 = por %p58, %p59
    %p61 = scmp.ne.s32.totalorder %s52, %s53
    %p62 = scmp.eq.s32.totalorder %s21, 0
    %p63 = por %p61, %p62
    %p64 = scmp.ne.s32.totalorder %s52, %s53
    %p65 = scmp.eq.s32.totalorder %s22, 1
    %p66 = por %p64, %p65
    %p68 = scmp.ne.s32.totalorder %s53, %s67
    %p69 = scmp.eq.s32.totalorder %s22, 0
    %p70 = por %p68, %p69
    %s72 = sadd.s32 %s71, 1
    %p75 = scmp.eq.s32.totalorder %s16, 1
    %p76 = scmp.ne.s32.totalorder %s71, %s73
    %p77 = scmp.eq.s32.totalorder %s16, 0
    %p78 = por %p76, %p77
    %p79 = scmp.ne.s32.totalorder %s71, %s73
    %p80 = scmp.eq.s32.totalorder %s21, 1
    %p81 = por %p79, %p80
    %p82 = scmp.ne.s32.totalorder %s73, %s74
    %p83 = scmp.eq.s32.totalorder %s21, 0
    %p84 = por %p82, %p83
    %p85 = scmp.ne.s32.totalorder %s73, %s74
    %p86 = scmp.eq.s32.totalorder %s22, 1
    %p87 = por %p85, %p86
    %p89 = scmp.ne.s32.totalorder %s74, %s88
    %p90 = scmp.eq.s32.totalorder %s22, 0
    %p91 = por %p89, %p90
    %s93 = sadd.s32 %s92, 1
    %p96 = scmp.eq.s32.totalorder %s16, 1
    %p97 = scmp.ne.s32.totalorder %s92, %s94
    %p98 = scmp.eq.s32.totalorder %s16, 0
    %p99 = por %p97, %p98
    %p100 = scmp.ne.s32.totalorder %s92, %s94
    %p101 = scmp.eq.s32.totalorder %s21, 1
    %p102 = por %p100, %p101
    %p103 = scmp.ne.s32.totalorder %s94, %s95
    %p104 = scmp.eq.s32.totalorder %s21, 0
    %p105 = por %p103, %p104
    %p106 = scmp.ne.s32.totalorder %s94, %s95
    %p107 = scmp.eq.s32.totalorder %s22, 1
    %p108 = por %p106, %p107
    %p110 = scmp.ne.s32.totalorder %s95, %s109
    %p111 = scmp.eq.s32.totalorder %s22, 0
    %p112 = por %p110, %p111
    %s114 = sadd.s32 %s113, 1
    %p117 = scmp.eq.s32.totalorder %s16, 1
    %p118 = scmp.ne.s32.totalorder %s113, %s115
    %p119 = scmp.eq.s32.totalorder %s16, 0
    %p120 = por %p118, %p119
    %p121 = scmp.ne.s32.totalorder %s113, %s115
    %p122 = scmp.eq.s32.totalorder %s21, 1
    %p123 = por %p121, %p122
    %p124 = scmp.ne.s32.totalorder %s115, %s116
    %p125 = scmp.eq.s32.totalorder %s21, 0
    %p126 = por %p124, %p125
    %p127 = scmp.ne.s32.totalorder %s115, %s116
    %p128 = scmp.eq.s32.totalorder %s22, 1
    %p129 = por %p127, %p128
    %p131 = scmp.ne.s32.totalorder %s116, %s130
    %p132 = scmp.eq.s32.totalorder %s22, 0
    %p133 = por %p131, %p132
    %s135 = sadd.s32 %s134, 1
    %p138 = scmp.eq.s32.totalorder %s16, 1
    %p139 = scmp.ne.s32.totalorder %s134, %s136
    %p140 = scmp.eq.s32.totalorder %s16, 0
    %p141 = por %p139, %p140
    %p142 = scmp.ne.s32.totalorder %s134, %s136
    %p143 = scmp.eq.s32.totalorder %s21, 1
    %p144 = por %p142, %p143
    %p145 = scmp.ne.s32.totalorder %s136, %s137
    %p146 = scmp.eq.s32.totalorder %s21, 0
    %p147 = por %p145, %p146
    %p148 = scmp.ne.s32.totalorder %s136, %s137
    %p149 = scmp.eq.s32.totalorder %s22, 1
    %p150 = por %p148, %p149
    %p152 = scmp.ne.s32.totalorder %s137, %s151
    %p153 = scmp.eq.s32.totalorder %s22, 0
    %p154 = por %p152, %p153
    %s156 = sadd.s32 %s155, 1
    %p159 = scmp.eq.s32.totalorder %s16, 1
    %p160 = scmp.ne.s32.totalorder %s155, %s157
    %p161 = scmp.eq.s32.totalorder %s16, 0
    %p162 = por %p160, %p161
    %p163 = scmp.ne.s32.totalorder %s155, %s157
    %p164 = scmp.eq.s32.totalorder %s21, 1
    %p165 = por %p163, %p164
    %p166 = scmp.ne.s32.totalorder %s157, %s158
    %p167 = scmp.eq.s32.totalorder %s21, 0
    %p168 = por %p166, %p167
    %p169 = scmp.ne.s32.totalorder %s157, %s158
    %p170 = scmp.eq.s32.totalorder %s22, 1
    %p171 = por %p169, %p170
    %p173 = scmp.ne.s32.totalorder %s158, %s172
    %p174 = scmp.eq.s32.totalorder %s22, 0
    %p175 = por %p173, %p174
    %s177 = sadd.s32 %s176, 1
    %p180 = scmp.eq.s32.totalorder %s16, 1
    %p181 = scmp.ne.s32.totalorder %s176, %s178
    %p182 = scmp.eq.s32.totalorder %s16, 0
    %p183 = por %p181, %p182
    %p184 = scmp.ne.s32.totalorder %s176, %s178
    %p185 = scmp.eq.s32.totalorder %s21, 1
    %p186 = por %p184, %p185
    %p187 = scmp.ne.s32.totalorder %s178, %s179
    %p188 = scmp.eq.s32.totalorder %s21, 0
    %p189 = por %p187, %p188
    %p190 = scmp.ne.s32.totalorder %s178, %s179
    %p191 = scmp.eq.s32.totalorder %s22, 1
    %p192 = por %p190, %p191
    %p194 = scmp.ne.s32.totalorder %s179, %s193
    %p195 = scmp.eq.s32.totalorder %s22, 0
    %p196 = por %p194, %p195
    %s198 = sadd.s32 %s197, 1
    %p201 = scmp.eq.s32.totalorder %s16, 1
    %p202 = scmp.ne.s32.totalorder %s197, %s199
    %p203 = scmp.eq.s32.totalorder %s16, 0
    %p204 = por %p202, %p203
    %p205 = scmp.ne.s32.totalorder %s197, %s199
    %p206 = scmp.eq.s32.totalorder %s21, 1
    %p207 = por %p205, %p206
    %p208 = scmp.ne.s32.totalorder %s199, %s200
    %p209 = scmp.eq.s32.totalorder %s21, 0
    %p210 = por %p208, %p209
    %p211 = scmp.ne.s32.totalorder %s199, %s200
    %p212 = scmp.eq.s32.totalorder %s22, 1
    %p213 = por %p211, %p212
    %p215 = scmp.ne.s32.totalorder %s200, %s214
    %p216 = scmp.eq.s32.totalorder %s22, 0
    %p217 = por %p215, %p216
    %s219 = sadd.s32 %s218, 1
    %p222 = scmp.eq.s32.totalorder %s16, 1
    %p223 = scmp.ne.s32.totalorder %s218, %s220
    %p224 = scmp.eq.s32.totalorder %s16, 0
    %p225 = por %p223, %p224
    %p226 = scmp.ne.s32.totalorder %s218, %s220
    %p227 = scmp.eq.s32.totalorder %s21, 1
    %p228 = por %p226, %p227
    %p229 = scmp.ne.s32.totalorder %s220, %s221
    %p230 = scmp.eq.s32.totalorder %s21, 0
    %p231 = por %p229, %p230
    %p232 = scmp.ne.s32.totalorder %s220, %s221
    %p233 = scmp.eq.s32.totalorder %s22, 1
    %p234 = por %p232, %p233
    %p236 = scmp.ne.s32.totalorder %s221, %s235
    %p237 = scmp.eq.s32.totalorder %s22, 0
    %p238 = por %p236, %p237
    %s239 = ssub.s32 %s16, %s23
    %p240 = scmp.eq.s32.totalorder %s239, 0
    %s242 = sadd.s32 %s241, 1
    %s243 = scalar_select %p240, %s241, %s242
    %p246 = pneg %p240
    %p247 = scmp.eq.s32.totalorder %s16, 1
    %p248 = por %p246, %p247
    %p249 = scmp.ne.s32.totalorder %s241, %s244
    %p250 = scmp.eq.s32.totalorder %s16, 0
    %p251 = por %p249, %p250
    %p252 = scmp.ne.s32.totalorder %s241, %s244
    %p253 = scmp.eq.s32.totalorder %s21, 1
    %p254 = por %p252, %p253
    %p255 = scmp.ne.s32.totalorder %s244, %s245
    %p256 = scmp.eq.s32.totalorder %s21, 0
    %p257 = por %p255, %p256
    %p258 = scmp.ne.s32.totalorder %s244, %s245
    %p259 = scmp.eq.s32.totalorder %s22, 1
    %p260 = por %p258, %p259
    %p262 = scmp.ne.s32.totalorder %s245, %s261
    %p263 = scmp.eq.s32.totalorder %s22, 0
    %p264 = por %p262, %p263
    %p265 = scmp.le.s32.totalorder 1, %s16
    %p266 = scmp.lt.s32.totalorder %s16, 3
    %p267 = pnand %p265, %p266
    %p268 = pneg %p267
    // Predicated region
    $region9: #{channel_attention.1} parent=5 // pred_check
      _
    $region10: #{channel_attention.1} parent=5 // pred_check_branch
      %270 = sbr.rel (%p267) target = $region12
    $region11: #{channel_attention.1} parent=5 // pred_region
      %s271 = ssub.s32 %s16, 1
      // Predicated region
      $region13: #{channel_attention.1} parent=11 // pred_check
        %p272 = pneg %p63
      $region14: #{channel_attention.1} parent=11 // pred_check_branch
        %274 = sbr.rel (%p272) target = $region16
      $region15: #{channel_attention.1} parent=11 // pred_region
        _
      $region16: #{channel_attention.1} parent=11 // pred_fallthru
        _
      // Predicated region
      $region17: #{channel_attention.1} parent=11 // pred_check
        %p275 = pneg %p84
      $region18: #{channel_attention.1} parent=11 // pred_check_branch
        %277 = sbr.rel (%p275) target = $region20
      $region19: #{channel_attention.1} parent=11 // pred_region
        _
      $region20: #{channel_attention.1} parent=11 // pred_fallthru
        _
      // Predicated region
      $region21: #{channel_attention.1} parent=11 // pred_check
        %p278 = pneg %p105
      $region22: #{channel_attention.1} parent=11 // pred_check_branch
        %280 = sbr.rel (%p278) target = $region24
      $region23: #{channel_attention.1} parent=11 // pred_region
        _
      $region24: #{channel_attention.1} parent=11 // pred_fallthru
        _
      // Predicated region
      $region25: #{channel_attention.1} parent=11 // pred_check
        %p281 = pneg %p126
      $region26: #{channel_attention.1} parent=11 // pred_check_branch
        %283 = sbr.rel (%p281) target = $region28
      $region27: #{channel_attention.1} parent=11 // pred_region
        _
      $region28: #{channel_attention.1} parent=11 // pred_fallthru
        _
      // Predicated region
      $region29: #{channel_attention.1} parent=11 // pred_check
        %p284 = pneg %p147
      $region30: #{channel_attention.1} parent=11 // pred_check_branch
        %286 = sbr.rel (%p284) target = $region32
      $region31: #{channel_attention.1} parent=11 // pred_region
        _
      $region32: #{channel_attention.1} parent=11 // pred_fallthru
        _
      // Predicated region
      $region33: #{channel_attention.1} parent=11 // pred_check
        %p287 = pneg %p168
      $region34: #{channel_attention.1} parent=11 // pred_check_branch
        %289 = sbr.rel (%p287) target = $region36
      $region35: #{channel_attention.1} parent=11 // pred_region
        _
      $region36: #{channel_attention.1} parent=11 // pred_fallthru
        _
      // Predicated region
      $region37: #{channel_attention.1} parent=11 // pred_check
        %p290 = pneg %p189
      $region38: #{channel_attention.1} parent=11 // pred_check_branch
        %292 = sbr.rel (%p290) target = $region40
      $region39: #{channel_attention.1} parent=11 // pred_region
        _
      $region40: #{channel_attention.1} parent=11 // pred_fallthru
        _
      // Predicated region
      $region41: #{channel_attention.1} parent=11 // pred_check
        %p293 = pneg %p210
      $region42: #{channel_attention.1} parent=11 // pred_check_branch
        %295 = sbr.rel (%p293) target = $region44
      $region43: #{channel_attention.1} parent=11 // pred_region
        _
      $region44: #{channel_attention.1} parent=11 // pred_fallthru
        _
      // Predicated region
      $region45: #{channel_attention.1} parent=11 // pred_check
        %p296 = pneg %p231
      $region46: #{channel_attention.1} parent=11 // pred_check_branch
        %298 = sbr.rel (%p296) target = $region48
      $region47: #{channel_attention.1} parent=11 // pred_region
        _
      $region48: #{channel_attention.1} parent=11 // pred_fallthru
        _
    $region12: #{channel_attention.1} parent=5 // pred_fallthru
      _
    %p299 = scmp.lt.s32.totalorder %s16, 2
    // Predicated region
    $region49: #{channel_attention.1} parent=5 // pred_check
      %p300 = pneg %p299
    $region50: #{channel_attention.1} parent=5 // pred_check_branch
      %302 = sbr.rel (%p300) target = $region52
    $region51: #{channel_attention.1} parent=5 // pred_region
      // Predicated region
      $region53: #{channel_attention.1} parent=51 // pred_check
        %p303 = pneg %p36
      $region54: #{channel_attention.1} parent=51 // pred_check_branch
        %305 = sbr.rel (%p303) target = $region56
      $region55: #{channel_attention.1} parent=51 // pred_region
        %p306 = scmp.lt.s32.totalorder %s16, 1
        %s307 = scalar_select %p306, %s16, 1
        %s308 = smul.addr %s307, 17
        %s309 = smul.addr %s308, 8
        %s310 = scalar_lea.vmem %s0, %s309
      $region56: #{channel_attention.1} parent=51 // pred_fallthru
        _
    $region52: #{channel_attention.1} parent=5 // pred_fallthru
      _
    %p311 = scmp.le.s32.totalorder 1, %s16
    %p312 = scmp.lt.s32.totalorder %s16, 3
    %p313 = pnand %p311, %p312
    %p314 = pneg %p313
    // Predicated region
    $region57: #{channel_attention.1} parent=5 // pred_check
      _
    $region58: #{channel_attention.1} parent=5 // pred_check_branch
      %316 = sbr.rel (%p313) target = $region60
    $region59: #{channel_attention.1} parent=5 // pred_region
      %s317 = ssub.s32 %s16, 1
      %p318 = scmp.lt.s32.totalorder %s21, 1
      %s319 = scalar_select %p318, %s21, 1
      %s320 = smul.addr %s319, 17
      %s321 = smul.addr %s320, 8
      %s322 = scalar_lea.vmem %s0, %s321
      %p323 = pneg %p42
      %p324 = pneg %p39
      %p325 = pneg %p63
      %p326 = pneg %p60
      %p327 = pneg %p84
      %p328 = pneg %p81
      %p329 = pneg %p105
      %p330 = pneg %p102
      %p331 = pneg %p126
      %p332 = pneg %p123
      %p333 = pneg %p147
      %p334 = pneg %p144
      %p335 = pneg %p168
      %p336 = pneg %p165
      %p337 = pneg %p189
      %p338 = pneg %p186
      %p339 = pneg %p210
      %p340 = pneg %p207
      %p341 = pneg %p231
      %p342 = pneg %p228
      %p343 = pneg %p257
      %p344 = pneg %p254
      %p345 = scmp.lt.s32.totalorder %s21, 1
      %s346 = scalar_select %p345, %s21, 1
      %s347 = smul.addr %s346, 17
      %s348 = smul.addr %s347, 8
      %s349 = scalar_lea.vmem %s10, %s348
      %p350 = scmp.lt.s32.totalorder %s21, 1
      %s351 = scalar_select %p350, %s21, 1
      %s352 = smul.addr %s351, 17
      %s353 = smul.addr %s352, 8
      %s354 = scalar_lea.vmem %s0, %s353
      %p355 = scmp.lt.s32.totalorder %s21, 1
      %s356 = scalar_select %p355, %s21, 1
      %s357 = smul.addr %s356, 17
      %s358 = smul.addr %s357, 8
      %s359 = scalar_lea.vmem %s10, %s358
      %v360 = vld [vmem:[%s354] sm:$0xff]
      %v361 = vld [vmem:[%s354 + $0x8] sm:$0xff]
      %v362 = vld [vmem:[%s354 + $0x10] sm:$0xff]
      %v363 = vld [vmem:[%s354 + $0x18] sm:$0xff]
      %v364 = vld [vmem:[%s354 + $0x20] sm:$0xff]
      %v365 = vld [vmem:[%s354 + $0x28] sm:$0xff]
      %v366 = vld [vmem:[%s354 + $0x30] sm:$0xff]
      %v367 = vld [vmem:[%s354 + $0x38] sm:$0xff]
      %v368 = vld [vmem:[%s354 + $0x40] sm:$0xff]
      %v369 = vld [vmem:[%s354 + $0x48] sm:$0xff]
      %v370 = vld [vmem:[%s354 + $0x50] sm:$0xff]
      %v371 = vld [vmem:[%s354 + $0x58] sm:$0xff]
      %v372 = vld [vmem:[%s354 + $0x60] sm:$0xff]
      %v373 = vld [vmem:[%s354 + $0x68] sm:$0xff]
      %v374 = vld [vmem:[%s354 + $0x70] sm:$0xff]
      %v375 = vld [vmem:[%s354 + $0x78] sm:$0xff]
      %v376 = vld [vmem:[%s354 + $0x80] sm:$0x7f]
      %v377 = vld [vmem:[%s2] sm:$0xff]
      %v378 = vld [vmem:[%s2 + $0x8] sm:$0xff]
      %v379 = vld [vmem:[%s2 + $0x10] sm:$0xff]
      %v380 = vld [vmem:[%s2 + $0x18] sm:$0xff]
      %v381 = vld [vmem:[%s2 + $0x20] sm:$0xff]
      %v382 = vld [vmem:[%s2 + $0x28] sm:$0xff]
      %v383 = vld [vmem:[%s2 + $0x30] sm:$0xff]
      %v384 = vld [vmem:[%s2 + $0x38] sm:$0xff]
      %vm385 = vcmask 523264
      %v387 = vsel %vm385, %v360, 0
      %v390 = vsel %vm385, %v361, 0
      %v393 = vsel %vm385, %v362, 0
      %v396 = vsel %vm385, %v363, 0
      %v399 = vsel %vm385, %v364, 0
      %v402 = vsel %vm385, %v365, 0
      %v405 = vsel %vm385, %v366, 0
      %v408 = vsel %vm385, %v367, 0
      %v411 = vsel %vm385, %v368, 0
      %v414 = vsel %vm385, %v369, 0
      %v417 = vsel %vm385, %v370, 0
      %v420 = vsel %vm385, %v371, 0
      %v423 = vsel %vm385, %v372, 0
      %v426 = vsel %vm385, %v373, 0
      %v429 = vsel %vm385, %v374, 0
      %v432 = vsel %vm385, %v375, 0
      %v435 = vsel %vm385, %v376, 0
      %437 = vmatprep.subr.mxu0 0.0
      %438 = vmatpush1.msra.mxu0 %v377
      %439 = vmatprep.subr.mxu0 0.0
      %440 = vmatpush1.msra.mxu0 %v378
      %441 = vmatprep.subr.mxu0 0.0
      %442 = vmatpush1.msra.mxu0 %v379
      %443 = vmatprep.subr.mxu0 0.0
      %444 = vmatpush1.msra.mxu0 %v380
      %445 = vmatprep.subr.mxu0 0.0
      %446 = vmatpush1.msra.mxu0 %v381
      %447 = vmatprep.subr.mxu0 0.0
      %448 = vmatpush1.msra.mxu0 %v382
      %449 = vmatprep.subr.mxu0 0.0
      %450 = vmatpush1.msra.mxu0 %v383
      %451 = vmatprep.subr.mxu0 0.0
      %452 = vmatpush1.msra.mxu0 %v384
      %453 = vmatprep.subr.mxu0 0.0
      %454 = vmatpush1.msra.mxu0 0.0
      %455 = vmatprep.subr.mxu0 0.0
      %456 = vmatpush1.msra.mxu0 0.0
      %457 = vmatprep.subr.mxu0 0.0
      %458 = vmatpush1.msra.mxu0 0.0
      %459 = vmatprep.subr.mxu0 0.0
      %460 = vmatpush1.msra.mxu0 0.0
      %461 = vmatprep.subr.mxu0 0.0
      %462 = vmatpush1.msra.mxu0 0.0
      %463 = vmatprep.subr.mxu0 0.0
      %464 = vmatpush1.msra.mxu0 0.0
      %465 = vmatprep.subr.mxu0 0.0
      %466 = vmatpush1.msra.mxu0 0.0
      %467 = vmatprep.subr.mxu0 0.0
      %468 = vmatpush1.msra.mxu0 0.0
      %469 = vmatprep.subr.mxu0 0.0
      %470 = vmatpush1.msra.mxu0 0.0
      %471 = vmatprep.subr.mxu0 0.0
      %472 = vmatpush1.msra.mxu0 0.0
      %473 = vmatprep.subr.mxu0 0.0
      %474 = vmatpush1.msra.mxu0 0.0
      %475 = vmatprep.subr.mxu0 0.0
      %476 = vmatpush1.msra.mxu0 0.0
      %477 = vmatprep.subr.mxu0 0.0
      %478 = vmatpush1.msra.mxu0 0.0
      %479 = vmatprep.subr.mxu0 0.0
      %480 = vmatpush1.msra.mxu0 0.0
      %481 = vmatprep.subr.mxu0 0.0
      %482 = vmatpush1.msra.mxu0 0.0
      %483 = vmatprep.subr.mxu0 0.0
      %484 = vmatpush1.msra.mxu0 0.0
      %485 = vmatprep.subr.mxu0 0.0
      %486 = vmatpush1.msra.mxu0 0.0
      %487 = vmatprep.subr.mxu0 0.0
      %488 = vmatpush1.msra.mxu0 0.0
      %489 = vmatprep.subr.mxu0 0.0
      %490 = vmatpush1.msra.mxu0 0.0
      %491 = vmatprep.subr.mxu0 0.0
      %492 = vmatpush1.msra.mxu0 0.0
      %493 = vmatprep.subr.mxu0 0.0
      %494 = vmatpush1.msra.mxu0 0.0
      %495 = vmatprep.subr.mxu0 0.0
      %496 = vmatpush1.msra.mxu0 0.0
      %497 = vmatprep.subr.mxu0 0.0
      %498 = vmatpush1.msra.mxu0 0.0
      %499 = vmatprep.subr.mxu0 0.0
      %500 = vmatpush1.msra.mxu0 0.0
      %501 = vmatprep.mubr.f32.mxu0 0.0
      %502 = vmatmul.mubr.f32.gmra.mrb[0].mxu0 %v387
      %v503 = vpop.f32.mrb[0].mxu0
      %v504 = vadd.f32 0.0, %v503
      %v505 = vpop.f32.mrb[0].mxu0
      %506 = vmatprep.mubr.f32.mxu0 0.0
      %507 = vmatmul.mubr.f32.gmra.mrb[0].mxu0 %v390
      %v508 = vpop.f32.mrb[0].mxu0
      %v509 = vadd.f32 0.0, %v508
      %v510 = vpop.f32.mrb[0].mxu0
      %511 = vmatprep.mubr.f32.mxu0 0.0
      %512 = vmatmul.mubr.f32.gmra.mrb[0].mxu0 %v393
      %v513 = vpop.f32.mrb[0].mxu0
      %v514 = vadd.f32 0.0, %v513
      %v515 = vpop.f32.mrb[0].mxu0
      %516 = vmatprep.mubr.f32.mxu0 0.0
      %517 = vmatmul.mubr.f32.gmra.mrb[0].mxu0 %v396
      %v518 = vpop.f32.mrb[0].mxu0
      %v519 = vadd.f32 0.0, %v518
      %v520 = vpop.f32.mrb[0].mxu0
      %521 = vmatprep.mubr.f32.mxu0 0.0
      %522 = vmatmul.mubr.f32.gmra.mrb[0].mxu0 %v399
      %v523 = vpop.f32.mrb[0].mxu0
      %v524 = vadd.f32 0.0, %v523
      %v525 = vpop.f32.mrb[0].mxu0
      %526 = vmatprep.mubr.f32.mxu0 0.0
      %527 = vmatmul.mubr.f32.gmra.mrb[0].mxu0 %v402
      %v528 = vpop.f32.mrb[0].mxu0
      %v529 = vadd.f32 0.0, %v528
      %v530 = vpop.f32.mrb[0].mxu0
      %531 = vmatprep.mubr.f32.mxu0 0.0
      %532 = vmatmul.mubr.f32.gmra.mrb[0].mxu0 %v405
      %v533 = vpop.f32.mrb[0].mxu0
      %v534 = vadd.f32 0.0, %v533
      %v535 = vpop.f32.mrb[0].mxu0
      %536 = vmatprep.mubr.f32.mxu0 0.0
      %537 = vmatmul.mubr.f32.gmra.mrb[0].mxu0 %v408
      %v538 = vpop.f32.mrb[0].mxu0
      %v539 = vadd.f32 0.0, %v538
      %v540 = vpop.f32.mrb[0].mxu0
      %541 = vmatprep.mubr.f32.mxu0 0.0
      %542 = vmatmul.mubr.f32.gmra.mrb[0].mxu0 %v411
      %v543 = vpop.f32.mrb[0].mxu0
      %v544 = vadd.f32 0.0, %v543
      %v545 = vpop.f32.mrb[0].mxu0
      %546 = vmatprep.mubr.f32.mxu0 0.0
      %547 = vmatmul.mubr.f32.gmra.mrb[0].mxu0 %v414
      %v548 = vpop.f32.mrb[0].mxu0
      %v549 = vadd.f32 0.0, %v548
      %v550 = vpop.f32.mrb[0].mxu0
      %551 = vmatprep.mubr.f32.mxu0 0.0
      %552 = vmatmul.mubr.f32.gmra.mrb[0].mxu0 %v417
      %v553 = vpop.f32.mrb[0].mxu0
      %v554 = vadd.f32 0.0, %v553
      %v555 = vpop.f32.mrb[0].mxu0
      %556 = vmatprep.mubr.f32.mxu0 0.0
      %557 = vmatmul.mubr.f32.gmra.mrb[0].mxu0 %v420
      %v558 = vpop.f32.mrb[0].mxu0
      %v559 = vadd.f32 0.0, %v558
      %v560 = vpop.f32.mrb[0].mxu0
      %561 = vmatprep.mubr.f32.mxu0 0.0
      %562 = vmatmul.mubr.f32.gmra.mrb[0].mxu0 %v423
      %v563 = vpop.f32.mrb[0].mxu0
      %v564 = vadd.f32 0.0, %v563
      %v565 = vpop.f32.mrb[0].mxu0
      %566 = vmatprep.mubr.f32.mxu0 0.0
      %567 = vmatmul.mubr.f32.gmra.mrb[0].mxu0 %v426
      %v568 = vpop.f32.mrb[0].mxu0
      %v569 = vadd.f32 0.0, %v568
      %v570 = vpop.f32.mrb[0].mxu0
      %571 = vmatprep.mubr.f32.mxu0 0.0
      %572 = vmatmul.mubr.f32.gmra.mrb[0].mxu0 %v429
      %v573 = vpop.f32.mrb[0].mxu0
      %v574 = vadd.f32 0.0, %v573
      %v575 = vpop.f32.mrb[0].mxu0
      %576 = vmatprep.mubr.f32.mxu0 0.0
      %577 = vmatmul.mubr.f32.gmra.mrb[0].mxu0 %v432
      %v578 = vpop.f32.mrb[0].mxu0
      %v579 = vadd.f32 0.0, %v578
      %v580 = vpop.f32.mrb[0].mxu0
      %581 = vmatprep.mubr.f32.mxu0 0.0
      %582 = vmatmul.mubr.f32.gmra.mrb[0].mxu0 %v435
      %v583 = vpop.f32.mrb[0].mxu0
      %v584 = vadd.f32 0.0, %v583
      %v585 = vpop.f32.mrb[0].mxu0
      %586 = vdwg.mxu0
      %v587 = vsub.f32 %v360, %v504
      %v588 = vsub.f32 %v361, %v509
      %v589 = vsub.f32 %v362, %v514
      %v590 = vsub.f32 %v363, %v519
      %v591 = vsub.f32 %v364, %v524
      %v592 = vsub.f32 %v365, %v529
      %v593 = vsub.f32 %v366, %v534
      %v594 = vsub.f32 %v367, %v539
      %v595 = vsub.f32 %v368, %v544
      %v596 = vsub.f32 %v369, %v549
      %v597 = vsub.f32 %v370, %v554
      %v598 = vsub.f32 %v371, %v559
      %v599 = vsub.f32 %v372, %v564
      %v600 = vsub.f32 %v373, %v569
      %v601 = vsub.f32 %v374, %v574
      %v602 = vsub.f32 %v375, %v579
      %v603 = vsub.f32 %v376, %v584
      %v604 = vmul.f32 %v587, %v587
      %v605 = vmul.f32 %v588, %v588
      %v606 = vmul.f32 %v589, %v589
      %v607 = vmul.f32 %v590, %v590
      %v608 = vmul.f32 %v591, %v591
      %v609 = vmul.f32 %v592, %v592
      %v610 = vmul.f32 %v593, %v593
      %v611 = vmul.f32 %v594, %v594
      %v612 = vmul.f32 %v595, %v595
      %v613 = vmul.f32 %v596, %v596
      %v614 = vmul.f32 %v597, %v597
      %v615 = vmul.f32 %v598, %v598
      %v616 = vmul.f32 %v599, %v599
      %v617 = vmul.f32 %v600, %v600
      %v618 = vmul.f32 %v601, %v601
      %v619 = vmul.f32 %v602, %v602
      %v620 = vmul.f32 %v603, %v603
      %v622 = vsel %vm385, %v604, 0
      %v625 = vsel %vm385, %v605, 0
      %v628 = vsel %vm385, %v606, 0
      %v631 = vsel %vm385, %v607, 0
      %v634 = vsel %vm385, %v608, 0
      %v637 = vsel %vm385, %v609, 0
      %v640 = vsel %vm385, %v610, 0
      %v643 = vsel %vm385, %v611, 0
      %v646 = vsel %vm385, %v612, 0
      %v649 = vsel %vm385, %v613, 0
      %v652 = vsel %vm385, %v614, 0
      %v655 = vsel %vm385, %v615, 0
      %v658 = vsel %vm385, %v616, 0
      %v661 = vsel %vm385, %v617, 0
      %v664 = vsel %vm385, %v618, 0
      %v667 = vsel %vm385, %v619, 0
      %v670 = vsel %vm385, %v620, 0
      %672 = vmatprep.subr.mxu0 0.0
      %673 = vmatpush1.msra.mxu0 %v377
      %674 = vmatprep.subr.mxu0 0.0
      %675 = vmatpush1.msra.mxu0 %v378
      %676 = vmatprep.subr.mxu0 0.0
      %677 = vmatpush1.msra.mxu0 %v379
      %678 = vmatprep.subr.mxu0 0.0
      %679 = vmatpush1.msra.mxu0 %v380
      %680 = vmatprep.subr.mxu0 0.0
      %681 = vmatpush1.msra.mxu0 %v381
      %682 = vmatprep.subr.mxu0 0.0
      %683 = vmatpush1.msra.mxu0 %v382
      %684 = vmatprep.subr.mxu0 0.0
      %685 = vmatpush1.msra.mxu0 %v383
      %686 = vmatprep.subr.mxu0 0.0
      %687 = vmatpush1.msra.mxu0 %v384
      %688 = vmatprep.subr.mxu0 0.0
      %689 = vmatpush1.msra.mxu0 0.0
      %690 = vmatprep.subr.mxu0 0.0
      %691 = vmatpush1.msra.mxu0 0.0
      %692 = vmatprep.subr.mxu0 0.0
      %693 = vmatpush1.msra.mxu0 0.0
      %694 = vmatprep.subr.mxu0 0.0
      %695 = vmatpush1.msra.mxu0 0.0
      %696 = vmatprep.subr.mxu0 0.0
      %697 = vmatpush1.msra.mxu0 0.0
      %698 = vmatprep.subr.mxu0 0.0
      %699 = vmatpush1.msra.mxu0 0.0
      %700 = vmatprep.subr.mxu0 0.0
      %701 = vmatpush1.msra.mxu0 0.0
      %702 = vmatprep.subr.mxu0 0.0
      %703 = vmatpush1.msra.mxu0 0.0
      %704 = vmatprep.subr.mxu0 0.0
      %705 = vmatpush1.msra.mxu0 0.0
      %706 = vmatprep.subr.mxu0 0.0
      %707 = vmatpush1.msra.mxu0 0.0
      %708 = vmatprep.subr.mxu0 0.0
      %709 = vmatpush1.msra.mxu0 0.0
      %710 = vmatprep.subr.mxu0 0.0
      %711 = vmatpush1.msra.mxu0 0.0
      %712 = vmatprep.subr.mxu0 0.0
      %713 = vmatpush1.msra.mxu0 0.0
      %714 = vmatprep.subr.mxu0 0.0
      %715 = vmatpush1.msra.mxu0 0.0
      %716 = vmatprep.subr.mxu0 0.0
      %717 = vmatpush1.msra.mxu0 0.0
      %718 = vmatprep.subr.mxu0 0.0
      %719 = vmatpush1.msra.mxu0 0.0
      %720 = vmatprep.subr.mxu0 0.0
      %721 = vmatpush1.msra.mxu0 0.0
      %722 = vmatprep.subr.mxu0 0.0
      %723 = vmatpush1.msra.mxu0 0.0
      %724 = vmatprep.subr.mxu0 0.0
      %725 = vmatpush1.msra.mxu0 0.0
      %726 = vmatprep.subr.mxu0 0.0
      %727 = vmatpush1.msra.mxu0 0.0
      %728 = vmatprep.subr.mxu0 0.0
      %729 = vmatpush1.msra.mxu0 0.0
      %730 = vmatprep.subr.mxu0 0.0
      %731 = vmatpush1.msra.mxu0 0.0
      %732 = vmatprep.subr.mxu0 0.0
      %733 = vmatpush1.msra.mxu0 0.0
      %734 = vmatprep.subr.mxu0 0.0
      %735 = vmatpush1.msra.mxu0 0.0
      %736 = vmatprep.mubr.f32.mxu0 0.0
      %737 = vmatmul.mubr.f32.gmra.mrb[0].mxu0 %v622
      %v738 = vpop.f32.mrb[0].mxu0
      %v739 = vadd.f32 1e-05, %v738
      %v740 = vpop.f32.mrb[0].mxu0
      %741 = vmatprep.mubr.f32.mxu0 0.0
      %742 = vmatmul.mubr.f32.gmra.mrb[0].mxu0 %v625
      %v743 = vpop.f32.mrb[0].mxu0
      %v744 = vadd.f32 1e-05, %v743
      %v745 = vpop.f32.mrb[0].mxu0
      %746 = vmatprep.mubr.f32.mxu0 0.0
      %747 = vmatmul.mubr.f32.gmra.mrb[0].mxu0 %v628
      %v748 = vpop.f32.mrb[0].mxu0
      %v749 = vadd.f32 1e-05, %v748
      %v750 = vpop.f32.mrb[0].mxu0
      %751 = vmatprep.mubr.f32.mxu0 0.0
      %752 = vmatmul.mubr.f32.gmra.mrb[0].mxu0 %v631
      %v753 = vpop.f32.mrb[0].mxu0
      %v754 = vadd.f32 1e-05, %v753
      %v755 = vpop.f32.mrb[0].mxu0
      %756 = vmatprep.mubr.f32.mxu0 0.0
      %757 = vmatmul.mubr.f32.gmra.mrb[0].mxu0 %v634
      %v758 = vpop.f32.mrb[0].mxu0
      %v759 = vadd.f32 1e-05, %v758
      %v760 = vpop.f32.mrb[0].mxu0
      %761 = vmatprep.mubr.f32.mxu0 0.0
      %762 = vmatmul.mubr.f32.gmra.mrb[0].mxu0 %v637
      %v763 = vpop.f32.mrb[0].mxu0
      %v764 = vadd.f32 1e-05, %v763
      %v765 = vpop.f32.mrb[0].mxu0
      %766 = vmatprep.mubr.f32.mxu0 0.0
      %767 = vmatmul.mubr.f32.gmra.mrb[0].mxu0 %v640
      %v768 = vpop.f32.mrb[0].mxu0
      %v769 = vadd.f32 1e-05, %v768
      %v770 = vpop.f32.mrb[0].mxu0
      %771 = vmatprep.mubr.f32.mxu0 0.0
      %772 = vmatmul.mubr.f32.gmra.mrb[0].mxu0 %v643
      %v773 = vpop.f32.mrb[0].mxu0
      %v774 = vadd.f32 1e-05, %v773
      %v775 = vpop.f32.mrb[0].mxu0
      %776 = vmatprep.mubr.f32.mxu0 0.0
      %777 = vmatmul.mubr.f32.gmra.mrb[0].mxu0 %v646
      %v778 = vpop.f32.mrb[0].mxu0
      %v779 = vadd.f32 1e-05, %v778
      %v780 = vpop.f32.mrb[0].mxu0
      %781 = vmatprep.mubr.f32.mxu0 0.0
      %782 = vmatmul.mubr.f32.gmra.mrb[0].mxu0 %v649
      %v783 = vpop.f32.mrb[0].mxu0
      %v784 = vadd.f32 1e-05, %v783
      %v785 = vpop.f32.mrb[0].mxu0
      %786 = vmatprep.mubr.f32.mxu0 0.0
      %787 = vmatmul.mubr.f32.gmra.mrb[0].mxu0 %v652
      %v788 = vpop.f32.mrb[0].mxu0
      %v789 = vadd.f32 1e-05, %v788
      %v790 = vpop.f32.mrb[0].mxu0
      %791 = vmatprep.mubr.f32.mxu0 0.0
      %792 = vmatmul.mubr.f32.gmra.mrb[0].mxu0 %v655
      %v793 = vpop.f32.mrb[0].mxu0
      %v794 = vadd.f32 1e-05, %v793
      %v795 = vpop.f32.mrb[0].mxu0
      %796 = vmatprep.mubr.f32.mxu0 0.0
      %797 = vmatmul.mubr.f32.gmra.mrb[0].mxu0 %v658
      %v798 = vpop.f32.mrb[0].mxu0
      %v799 = vadd.f32 1e-05, %v798
      %v800 = vpop.f32.mrb[0].mxu0
      %801 = vmatprep.mubr.f32.mxu0 0.0
      %802 = vmatmul.mubr.f32.gmra.mrb[0].mxu0 %v661
      %v803 = vpop.f32.mrb[0].mxu0
      %v804 = vadd.f32 1e-05, %v803
      %v805 = vpop.f32.mrb[0].mxu0
      %806 = vmatprep.mubr.f32.mxu0 0.0
      %807 = vmatmul.mubr.f32.gmra.mrb[0].mxu0 %v664
      %v808 = vpop.f32.mrb[0].mxu0
      %v809 = vadd.f32 1e-05, %v808
      %v810 = vpop.f32.mrb[0].mxu0
      %811 = vmatprep.mubr.f32.mxu0 0.0
      %812 = vmatmul.mubr.f32.gmra.mrb[0].mxu0 %v667
      %v813 = vpop.f32.mrb[0].mxu0
      %v814 = vadd.f32 1e-05, %v813
      %v815 = vpop.f32.mrb[0].mxu0
      %816 = vmatprep.mubr.f32.mxu0 0.0
      %817 = vmatmul.mubr.f32.gmra.mrb[0].mxu0 %v670
      %v818 = vpop.f32.mrb[0].mxu0
      %v819 = vadd.f32 1e-05, %v818
      %v820 = vpop.f32.mrb[0].mxu0
      %821 = vdwg.mxu0
      %v822 = vrsqrt.pop %v739
      %v823 = vrsqrt.pop %v744
      %v824 = vrsqrt.pop %v749
      %v825 = vrsqrt.pop %v754
      %v826 = vrsqrt.pop %v759
      %v827 = vrsqrt.pop %v764
      %v828 = vrsqrt.pop %v769
      %v829 = vrsqrt.pop %v774
      %v830 = vrsqrt.pop %v779
      %v831 = vrsqrt.pop %v784
      %v832 = vrsqrt.pop %v789
      %v833 = vrsqrt.pop %v794
      %v834 = vrsqrt.pop %v799
      %v835 = vrsqrt.pop %v804
      %v836 = vrsqrt.pop %v809
      %v837 = vrsqrt.pop %v814
      %v838 = vrsqrt.pop %v819
      %v839 = vmul.f32 %v587, %v822
      %v840 = vmul.f32 %v588, %v823
      %v841 = vmul.f32 %v589, %v824
      %v842 = vmul.f32 %v590, %v825
      %v843 = vmul.f32 %v591, %v826
      %v844 = vmul.f32 %v592, %v827
      %v845 = vmul.f32 %v593, %v828
      %v846 = vmul.f32 %v594, %v829
      %v847 = vmul.f32 %v595, %v830
      %v848 = vmul.f32 %v596, %v831
      %v849 = vmul.f32 %v597, %v832
      %v850 = vmul.f32 %v598, %v833
      %v851 = vmul.f32 %v599, %v834
      %v852 = vmul.f32 %v600, %v835
      %v853 = vmul.f32 %v601, %v836
      %v854 = vmul.f32 %v602, %v837
      %v855 = vmul.f32 %v603, %v838
      %v856 = vld [vmem:[%s1] sm:$0x77]
      %v858 = vcombine.high %v856, %v856
      %vm859 = vcmask 56320
      %v860 = vsel %vm859, %v858, 0
      %vm862 = vcmask 1046528
      %v864 = vsel %vm862, %v855, 0
      %866 = vmatprep.subr.mxu0 0.0
      %867 = vmatpush1.msra.mxu0 %v839
      %868 = vmatprep.subr.mxu0 0.0
      %869 = vmatpush1.msra.mxu0 %v840
      %870 = vmatprep.subr.mxu0 0.0
      %871 = vmatpush1.msra.mxu0 %v841
      %872 = vmatprep.subr.mxu0 0.0
      %873 = vmatpush1.msra.mxu0 %v842
      %874 = vmatprep.subr.mxu0 0.0
      %875 = vmatpush1.msra.mxu0 %v843
      %876 = vmatprep.subr.mxu0 0.0
      %877 = vmatpush1.msra.mxu0 %v844
      %878 = vmatprep.subr.mxu0 0.0
      %879 = vmatpush1.msra.mxu0 %v845
      %880 = vmatprep.subr.mxu0 0.0
      %881 = vmatpush1.msra.mxu0 %v846
      %882 = vmatprep.subr.mxu0 0.0
      %883 = vmatpush1.msra.mxu0 %v847
      %884 = vmatprep.subr.mxu0 0.0
      %885 = vmatpush1.msra.mxu0 %v848
      %886 = vmatprep.subr.mxu0 0.0
      %887 = vmatpush1.msra.mxu0 %v849
      %888 = vmatprep.subr.mxu0 0.0
      %889 = vmatpush1.msra.mxu0 %v850
      %890 = vmatprep.subr.mxu0 0.0
      %891 = vmatpush1.msra.mxu0 %v851
      %892 = vmatprep.subr.mxu0 0.0
      %893 = vmatpush1.msra.mxu0 %v852
      %894 = vmatprep.subr.mxu0 0.0
      %895 = vmatpush1.msra.mxu0 %v853
      %896 = vmatprep.subr.mxu0 0.0
      %897 = vmatpush1.msra.mxu0 %v854
      %898 = vmatprep.subr.mxu0 0.0
      %899 = vmatpush1.msra.mxu0 %v864
      %900 = vmatprep.subr.mxu0 0.0
      %901 = vmatpush1.msra.mxu0 0.0
      %902 = vmatprep.subr.mxu0 0.0
      %903 = vmatpush1.msra.mxu0 0.0
      %904 = vmatprep.subr.mxu0 0.0
      %905 = vmatpush1.msra.mxu0 0.0
      %906 = vmatprep.subr.mxu0 0.0
      %907 = vmatpush1.msra.mxu0 0.0
      %908 = vmatprep.subr.mxu0 0.0
      %909 = vmatpush1.msra.mxu0 0.0
      %910 = vmatprep.subr.mxu0 0.0
      %911 = vmatpush1.msra.mxu0 0.0
      %912 = vmatprep.subr.mxu0 0.0
      %913 = vmatpush1.msra.mxu0 0.0
      %914 = vmatprep.subr.mxu0 0.0
      %915 = vmatpush1.msra.mxu0 0.0
      %916 = vmatprep.subr.mxu0 0.0
      %917 = vmatpush1.msra.mxu0 0.0
      %918 = vmatprep.subr.mxu0 0.0
      %919 = vmatpush1.msra.mxu0 0.0
      %920 = vmatprep.subr.mxu0 0.0
      %921 = vmatpush1.msra.mxu0 0.0
      %922 = vmatprep.subr.mxu0 0.0
      %923 = vmatpush1.msra.mxu0 0.0
      %924 = vmatprep.subr.mxu0 0.0
      %925 = vmatpush1.msra.mxu0 0.0
      %926 = vmatprep.subr.mxu0 0.0
      %927 = vmatpush1.msra.mxu0 0.0
      %928 = vmatprep.subr.mxu0 0.0
      %929 = vmatpush1.msra.mxu0 0.0
      %930 = vmatprep.mubr.f32.mxu0 %v860
      %931 = vmatmul.mubr.f32.gmra.mrb[0].mxu0 %v856
      %v932 = vpop.f32.mrb[0].mxu0
      %v933 = vadd.f32 0.0, %v932
      %v934 = vpop.f32.mrb[0].mxu0
      %935 = vdwg.mxu0
      %v936 = vld [vmem:[%s3] sm:$0xff]
      %v937 = vld [vmem:[%s3 + $0x8] sm:$0xff]
      %v938 = vld [vmem:[%s3 + $0x10] sm:$0xff]
      %v939 = vld [vmem:[%s3 + $0x18] sm:$0xff]
      %v940 = vld [vmem:[%s3 + $0x20] sm:$0xff]
      %v941 = vld [vmem:[%s3 + $0x28] sm:$0xff]
      %v942 = vld [vmem:[%s3 + $0x30] sm:$0xff]
      %v943 = vld [vmem:[%s3 + $0x38] sm:$0xff]
      %v944 = vld [vmem:[%s4] sm:$0x1]
      %v946 = vlaneseq
      %v947 = vshrl.u32 %v946, 7
      %v948 = vsub.s32 0, %v947
      %v949 = vrot.slane %v944, %v948
      %v952 = vsel %vm385, %v933, 0
      %954 = vmatprep.subr.mxu0 0.0
      %955 = vmatpush1.msra.mxu0 %v936
      %956 = vmatprep.subr.mxu0 0.0
      %957 = vmatpush1.msra.mxu0 %v937
      %958 = vmatprep.subr.mxu0 0.0
      %959 = vmatpush1.msra.mxu0 %v938
      %960 = vmatprep.subr.mxu0 0.0
      %961 = vmatpush1.msra.mxu0 %v939
      %962 = vmatprep.subr.mxu0 0.0
      %963 = vmatpush1.msra.mxu0 %v940
      %964 = vmatprep.subr.mxu0 0.0
      %965 = vmatpush1.msra.mxu0 %v941
      %966 = vmatprep.subr.mxu0 0.0
      %967 = vmatpush1.msra.mxu0 %v942
      %968 = vmatprep.subr.mxu0 0.0
      %969 = vmatpush1.msra.mxu0 %v943
      %970 = vmatprep.subr.mxu0 0.0
      %971 = vmatpush1.msra.mxu0 0.0
      %972 = vmatprep.subr.mxu0 0.0
      %973 = vmatpush1.msra.mxu0 0.0
      %974 = vmatprep.subr.mxu0 0.0
      %975 = vmatpush1.msra.mxu0 0.0
      %976 = vmatprep.subr.mxu0 0.0
      %977 = vmatpush1.msra.mxu0 0.0
      %978 = vmatprep.subr.mxu0 0.0
      %979 = vmatpush1.msra.mxu0 0.0
      %980 = vmatprep.subr.mxu0 0.0
      %981 = vmatpush1.msra.mxu0 0.0
      %982 = vmatprep.subr.mxu0 0.0
      %983 = vmatpush1.msra.mxu0 0.0
      %984 = vmatprep.subr.mxu0 0.0
      %985 = vmatpush1.msra.mxu0 0.0
      %986 = vmatprep.subr.mxu0 0.0
      %987 = vmatpush1.msra.mxu0 0.0
      %988 = vmatprep.subr.mxu0 0.0
      %989 = vmatpush1.msra.mxu0 0.0
      %990 = vmatprep.subr.mxu0 0.0
      %991 = vmatpush1.msra.mxu0 0.0
      %992 = vmatprep.subr.mxu0 0.0
      %993 = vmatpush1.msra.mxu0 0.0
      %994 = vmatprep.subr.mxu0 0.0
      %995 = vmatpush1.msra.mxu0 0.0
      %996 = vmatprep.subr.mxu0 0.0
      %997 = vmatpush1.msra.mxu0 0.0
      %998 = vmatprep.subr.mxu0 0.0
      %999 = vmatpush1.msra.mxu0 0.0
      %1000 = vmatprep.subr.mxu0 0.0
      %1001 = vmatpush1.msra.mxu0 0.0
      %1002 = vmatprep.subr.mxu0 0.0
      %1003 = vmatpush1.msra.mxu0 0.0
      %1004 = vmatprep.subr.mxu0 0.0
      %1005 = vmatpush1.msra.mxu0 0.0
      %1006 = vmatprep.subr.mxu0 0.0
      %1007 = vmatpush1.msra.mxu0 0.0
      %1008 = vmatprep.subr.mxu0 0.0
      %1009 = vmatpush1.msra.mxu0 0.0
      %1010 = vmatprep.subr.mxu0 0.0
      %1011 = vmatpush1.msra.mxu0 0.0
      %1012 = vmatprep.subr.mxu0 0.0
      %1013 = vmatpush1.msra.mxu0 0.0
      %1014 = vmatprep.subr.mxu0 0.0
      %1015 = vmatpush1.msra.mxu0 0.0
      %1016 = vmatprep.subr.mxu0 0.0
      %1017 = vmatpush1.msra.mxu0 0.0
      %1018 = vmatprep.mubr.f32.mxu0 0.0
      %1019 = vmatmul.mubr.f32.gmra.mrb[0].mxu0 %v952
      %v1020 = vpop.f32.mrb[0].mxu0
      %v1021 = vadd.f32 %v949, %v1020
      %v1022 = vpop.f32.mrb[0].mxu0
      %1023 = vdwg.mxu0
      %v1024 = vld [vmem:[%s5] sm:$0xff]
      %v1025 = vld [vmem:[%s5 + $0x8] sm:$0xff]
      %v1026 = vld [vmem:[%s5 + $0x10] sm:$0xff]
      %v1027 = vld [vmem:[%s5 + $0x18] sm:$0xff]
      %v1028 = vld [vmem:[%s5 + $0x20] sm:$0xff]
      %v1029 = vld [vmem:[%s5 + $0x28] sm:$0xff]
      %v1030 = vld [vmem:[%s5 + $0x30] sm:$0xff]
      %v1031 = vld [vmem:[%s5 + $0x38] sm:$0xff]
      %v1032 = vld [vmem:[%s6] sm:$0x1]
      %v1034 = vlaneseq
      %v1035 = vshrl.u32 %v1034, 7
      %v1036 = vsub.s32 0, %v1035
      %v1037 = vrot.slane %v1032, %v1036
      %v1040 = vsel %vm385, %v839, 0
      %v1043 = vsel %vm385, %v840, 0
      %v1046 = vsel %vm385, %v841, 0
      %v1049 = vsel %vm385, %v842, 0
      %v1052 = vsel %vm385, %v843, 0
      %v1055 = vsel %vm385, %v844, 0
      %v1058 = vsel %vm385, %v845, 0
      %v1061 = vsel %vm385, %v846, 0
      %v1064 = vsel %vm385, %v847, 0
      %v1067 = vsel %vm385, %v848, 0
      %v1070 = vsel %vm385, %v849, 0
      %v1073 = vsel %vm385, %v850, 0
      %v1076 = vsel %vm385, %v851, 0
      %v1079 = vsel %vm385, %v852, 0
      %v1082 = vsel %vm385, %v853, 0
      %v1085 = vsel %vm385, %v854, 0
      %v1087 = vsel %vm385, %v855, 0
      %1089 = vmatprep.subr.mxu0 0.0
      %1090 = vmatpush1.msra.mxu0 %v1024
      %1091 = vmatprep.subr.mxu0 0.0
      %1092 = vmatpush1.msra.mxu0 %v1025
      %1093 = vmatprep.subr.mxu0 0.0
      %1094 = vmatpush1.msra.mxu0 %v1026
      %1095 = vmatprep.subr.mxu0 0.0
      %1096 = vmatpush1.msra.mxu0 %v1027
      %1097 = vmatprep.subr.mxu0 0.0
      %1098 = vmatpush1.msra.mxu0 %v1028
      %1099 = vmatprep.subr.mxu0 0.0
      %1100 = vmatpush1.msra.mxu0 %v1029
      %1101 = vmatprep.subr.mxu0 0.0
      %1102 = vmatpush1.msra.mxu0 %v1030
      %1103 = vmatprep.subr.mxu0 0.0
      %1104 = vmatpush1.msra.mxu0 %v1031
      %1105 = vmatprep.subr.mxu0 0.0
      %1106 = vmatpush1.msra.mxu0 0.0
      %1107 = vmatprep.subr.mxu0 0.0
      %1108 = vmatpush1.msra.mxu0 0.0
      %1109 = vmatprep.subr.mxu0 0.0
      %1110 = vmatpush1.msra.mxu0 0.0
      %1111 = vmatprep.subr.mxu0 0.0
      %1112 = vmatpush1.msra.mxu0 0.0
      %1113 = vmatprep.subr.mxu0 0.0
      %1114 = vmatpush1.msra.mxu0 0.0
      %1115 = vmatprep.subr.mxu0 0.0
      %1116 = vmatpush1.msra.mxu0 0.0
      %1117 = vmatprep.subr.mxu0 0.0
      %1118 = vmatpush1.msra.mxu0 0.0
      %1119 = vmatprep.subr.mxu0 0.0
      %1120 = vmatpush1.msra.mxu0 0.0
      %1121 = vmatprep.subr.mxu0 0.0
      %1122 = vmatpush1.msra.mxu0 0.0
      %1123 = vmatprep.subr.mxu0 0.0
      %1124 = vmatpush1.msra.mxu0 0.0
      %1125 = vmatprep.subr.mxu0 0.0
      %1126 = vmatpush1.msra.mxu0 0.0
      %1127 = vmatprep.subr.mxu0 0.0
      %1128 = vmatpush1.msra.mxu0 0.0
      %1129 = vmatprep.subr.mxu0 0.0
      %1130 = vmatpush1.msra.mxu0 0.0
      %1131 = vmatprep.subr.mxu0 0.0
      %1132 = vmatpush1.msra.mxu0 0.0
      %1133 = vmatprep.subr.mxu0 0.0
      %1134 = vmatpush1.msra.mxu0 0.0
      %1135 = vmatprep.subr.mxu0 0.0
      %1136 = vmatpush1.msra.mxu0 0.0
      %1137 = vmatprep.subr.mxu0 0.0
      %1138 = vmatpush1.msra.mxu0 0.0
      %1139 = vmatprep.subr.mxu0 0.0
      %1140 = vmatpush1.msra.mxu0 0.0
      %1141 = vmatprep.subr.mxu0 0.0
      %1142 = vmatpush1.msra.mxu0 0.0
      %1143 = vmatprep.subr.mxu0 0.0
      %1144 = vmatpush1.msra.mxu0 0.0
      %1145 = vmatprep.subr.mxu0 0.0
      %1146 = vmatpush1.msra.mxu0 0.0
      %1147 = vmatprep.subr.mxu0 0.0
      %1148 = vmatpush1.msra.mxu0 0.0
      %1149 = vmatprep.subr.mxu0 0.0
      %1150 = vmatpush1.msra.mxu0 0.0
      %1151 = vmatprep.subr.mxu0 0.0
      %1152 = vmatpush1.msra.mxu0 0.0
      %1153 = vmatprep.mubr.f32.mxu0 0.0
      %1154 = vmatmul.mubr.f32.gmra.mrb[0].mxu0 %v1040
      %v1155 = vpop.f32.mrb[0].mxu0
      %v1156 = vadd.f32 %v1037, %v1155
      %v1157 = vpop.f32.mrb[0].mxu0
      %1158 = vmatprep.mubr.f32.mxu0 0.0
      %1159 = vmatmul.mubr.f32.gmra.mrb[0].mxu0 %v1043
      %v1160 = vpop.f32.mrb[0].mxu0
      %v1161 = vadd.f32 %v1037, %v1160
      %v1162 = vpop.f32.mrb[0].mxu0
      %1163 = vmatprep.mubr.f32.mxu0 0.0
      %1164 = vmatmul.mubr.f32.gmra.mrb[0].mxu0 %v1046
      %v1165 = vpop.f32.mrb[0].mxu0
      %v1166 = vadd.f32 %v1037, %v1165
      %v1167 = vpop.f32.mrb[0].mxu0
      %1168 = vmatprep.mubr.f32.mxu0 0.0
      %1169 = vmatmul.mubr.f32.gmra.mrb[0].mxu0 %v1049
      %v1170 = vpop.f32.mrb[0].mxu0
      %v1171 = vadd.f32 %v1037, %v1170
      %v1172 = vpop.f32.mrb[0].mxu0
      %1173 = vmatprep.mubr.f32.mxu0 0.0
      %1174 = vmatmul.mubr.f32.gmra.mrb[0].mxu0 %v1052
      %v1175 = vpop.f32.mrb[0].mxu0
      %v1176 = vadd.f32 %v1037, %v1175
      %v1177 = vpop.f32.mrb[0].mxu0
      %1178 = vmatprep.mubr.f32.mxu0 0.0
      %1179 = vmatmul.mubr.f32.gmra.mrb[0].mxu0 %v1055
      %v1180 = vpop.f32.mrb[0].mxu0
      %v1181 = vadd.f32 %v1037, %v1180
      %v1182 = vpop.f32.mrb[0].mxu0
      %1183 = vmatprep.mubr.f32.mxu0 0.0
      %1184 = vmatmul.mubr.f32.gmra.mrb[0].mxu0 %v1058
      %v1185 = vpop.f32.mrb[0].mxu0
      %v1186 = vadd.f32 %v1037, %v1185
      %v1187 = vpop.f32.mrb[0].mxu0
      %1188 = vmatprep.mubr.f32.mxu0 0.0
      %1189 = vmatmul.mubr.f32.gmra.mrb[0].mxu0 %v1061
      %v1190 = vpop.f32.mrb[0].mxu0
      %v1191 = vadd.f32 %v1037, %v1190
      %v1192 = vpop.f32.mrb[0].mxu0
      %1193 = vmatprep.mubr.f32.mxu0 0.0
      %1194 = vmatmul.mubr.f32.gmra.mrb[0].mxu0 %v1064
      %v1195 = vpop.f32.mrb[0].mxu0
      %v1196 = vadd.f32 %v1037, %v1195
      %v1197 = vpop.f32.mrb[0].mxu0
      %1198 = vmatprep.mubr.f32.mxu0 0.0
      %1199 = vmatmul.mubr.f32.gmra.mrb[0].mxu0 %v1067
      %v1200 = vpop.f32.mrb[0].mxu0
      %v1201 = vadd.f32 %v1037, %v1200
      %v1202 = vpop.f32.mrb[0].mxu0
      %1203 = vmatprep.mubr.f32.mxu0 0.0
      %1204 = vmatmul.mubr.f32.gmra.mrb[0].mxu0 %v1070
      %v1205 = vpop.f32.mrb[0].mxu0
      %v1206 = vadd.f32 %v1037, %v1205
      %v1207 = vpop.f32.mrb[0].mxu0
      %1208 = vmatprep.mubr.f32.mxu0 0.0
      %1209 = vmatmul.mubr.f32.gmra.mrb[0].mxu0 %v1073
      %v1210 = vpop.f32.mrb[0].mxu0
      %v1211 = vadd.f32 %v1037, %v1210
      %v1212 = vpop.f32.mrb[0].mxu0
      %1213 = vmatprep.mubr.f32.mxu0 0.0
      %1214 = vmatmul.mubr.f32.gmra.mrb[0].mxu0 %v1076
      %v1215 = vpop.f32.mrb[0].mxu0
      %v1216 = vadd.f32 %v1037, %v1215
      %v1217 = vpop.f32.mrb[0].mxu0
      %1218 = vmatprep.mubr.f32.mxu0 0.0
      %1219 = vmatmul.mubr.f32.gmra.mrb[0].mxu0 %v1079
      %v1220 = vpop.f32.mrb[0].mxu0
      %v1221 = vadd.f32 %v1037, %v1220
      %v1222 = vpop.f32.mrb[0].mxu0
      %1223 = vmatprep.mubr.f32.mxu0 0.0
      %1224 = vmatmul.mubr.f32.gmra.mrb[0].mxu0 %v1082
      %v1225 = vpop.f32.mrb[0].mxu0
      %v1226 = vadd.f32 %v1037, %v1225
      %v1227 = vpop.f32.mrb[0].mxu0
      %1228 = vmatprep.mubr.f32.mxu0 0.0
      %1229 = vmatmul.mubr.f32.gmra.mrb[0].mxu0 %v1085
      %v1230 = vpop.f32.mrb[0].mxu0
      %v1231 = vadd.f32 %v1037, %v1230
      %v1232 = vpop.f32.mrb[0].mxu0
      %1233 = vmatprep.mubr.f32.mxu0 0.0
      %1234 = vmatmul.mubr.f32.gmra.mrb[0].mxu0 %v1087
      %v1235 = vpop.f32.mrb[0].mxu0
      %v1236 = vadd.f32 %v1037, %v1235
      %v1237 = vpop.f32.mrb[0].mxu0
      %1238 = vdwg.mxu0
      %1239 = vxpose.xlu0.b32.start [1/16] %v1021, 128
      %1240 = vxpose.xlu0.b32.cont [2/16] 0.0, 128
      %1241 = vxpose.xlu0.b32.cont [3/16] 0.0, 128
      %1242 = vxpose.xlu0.b32.cont [4/16] 0.0, 128
      %1243 = vxpose.xlu0.b32.cont [5/16] 0.0, 128
      %1244 = vxpose.xlu0.b32.cont [6/16] 0.0, 128
      %1245 = vxpose.xlu0.b32.cont [7/16] 0.0, 128
      %1246 = vxpose.xlu0.b32.cont [8/16] 0.0, 128
      %1247 = vxpose.xlu0.b32.cont [9/16] 0.0, 128
      %1248 = vxpose.xlu0.b32.cont [10/16] 0.0, 128
      %1249 = vxpose.xlu0.b32.cont [11/16] 0.0, 128
      %1250 = vxpose.xlu0.b32.cont [12/16] 0.0, 128
      %1251 = vxpose.xlu0.b32.cont [13/16] 0.0, 128
      %1252 = vxpose.xlu0.b32.cont [14/16] 0.0, 128
      %1253 = vxpose.xlu0.b32.cont [15/16] 0.0, 128
      %1254 = vxpose.xlu0.b32.end [16/16] 0.0, 128
      %v1255 = vpop.trf.xlu0
      %v1256 = vpop.trf.xlu0
      %v1257 = vpop.trf.xlu0
      %v1258 = vpop.trf.xlu0
      %v1259 = vpop.trf.xlu0
      %v1260 = vpop.trf.xlu0
      %v1261 = vpop.trf.xlu0
      %v1262 = vpop.trf.xlu0
      %v1263 = vpop.trf.xlu0
      %v1264 = vpop.trf.xlu0
      %v1265 = vpop.trf.xlu0
      %v1266 = vpop.trf.xlu0
      %v1267 = vpop.trf.xlu0
      %v1268 = vpop.trf.xlu0
      %v1269 = vpop.trf.xlu0
      %v1270 = vpop.trf.xlu0
      %1272 = vrot.lane.b32.xlu0 %v1021, 64
      %v1273 = vpop.permute.xlu0 %1272
      %vm1274 = vcmask 23552
      %v1276 = vsel %vm1274, %v1255, 0
      %v1279 = vsel %vm1274, %v1256, 0
      %v1282 = vsel %vm1274, %v1257, 0
      %v1285 = vsel %vm1274, %v1258, 0
      %v1288 = vsel %vm1274, %v1259, 0
      %v1291 = vsel %vm1274, %v1260, 0
      %v1294 = vsel %vm1274, %v1261, 0
      %v1297 = vsel %vm1274, %v1262, 0
      %vm1299 = vcmask 1042432
      %v1300 = vsel %vm1299, %v1273, 0
      %1302 = vmatprep.subr.mxu0 0.0
      %1303 = vmatpush1.msra.mxu0 %v1300
      %1304 = vmatprep.subr.mxu0 0.0
      %1305 = vmatpush1.msra.mxu0 0.0
      %1306 = vmatprep.subr.mxu0 0.0
      %1307 = vmatpush1.msra.mxu0 0.0
      %1308 = vmatprep.subr.mxu0 0.0
      %1309 = vmatpush1.msra.mxu0 0.0
      %1310 = vmatprep.subr.mxu0 0.0
      %1311 = vmatpush1.msra.mxu0 0.0
      %1312 = vmatprep.subr.mxu0 0.0
      %1313 = vmatpush1.msra.mxu0 0.0
      %1314 = vmatprep.subr.mxu0 0.0
      %1315 = vmatpush1.msra.mxu0 0.0
      %1316 = vmatprep.subr.mxu0 0.0
      %1317 = vmatpush1.msra.mxu0 0.0
      %1318 = vmatprep.subr.mxu0 0.0
      %1319 = vmatpush1.msra.mxu0 0.0
      %1320 = vmatprep.subr.mxu0 0.0
      %1321 = vmatpush1.msra.mxu0 0.0
      %1322 = vmatprep.subr.mxu0 0.0
      %1323 = vmatpush1.msra.mxu0 0.0
      %1324 = vmatprep.subr.mxu0 0.0
      %1325 = vmatpush1.msra.mxu0 0.0
      %1326 = vmatprep.subr.mxu0 0.0
      %1327 = vmatpush1.msra.mxu0 0.0
      %1328 = vmatprep.subr.mxu0 0.0
      %1329 = vmatpush1.msra.mxu0 0.0
      %1330 = vmatprep.subr.mxu0 0.0
      %1331 = vmatpush1.msra.mxu0 0.0
      %1332 = vmatprep.subr.mxu0 0.0
      %1333 = vmatpush1.msra.mxu0 0.0
      %1334 = vmatprep.subr.mxu0 0.0
      %1335 = vmatpush1.msra.mxu0 0.0
      %1336 = vmatprep.subr.mxu0 0.0
      %1337 = vmatpush1.msra.mxu0 0.0
      %1338 = vmatprep.subr.mxu0 0.0
      %1339 = vmatpush1.msra.mxu0 0.0
      %1340 = vmatprep.subr.mxu0 0.0
      %1341 = vmatpush1.msra.mxu0 0.0
      %1342 = vmatprep.subr.mxu0 0.0
      %1343 = vmatpush1.msra.mxu0 0.0
      %1344 = vmatprep.subr.mxu0 0.0
      %1345 = vmatpush1.msra.mxu0 0.0
      %1346 = vmatprep.subr.mxu0 0.0
      %1347 = vmatpush1.msra.mxu0 0.0
      %1348 = vmatprep.subr.mxu0 0.0
      %1349 = vmatpush1.msra.mxu0 0.0
      %1350 = vmatprep.subr.mxu0 0.0
      %1351 = vmatpush1.msra.mxu0 0.0
      %1352 = vmatprep.subr.mxu0 0.0
      %1353 = vmatpush1.msra.mxu0 0.0
      %1354 = vmatprep.subr.mxu0 0.0
      %1355 = vmatpush1.msra.mxu0 0.0
      %1356 = vmatprep.subr.mxu0 0.0
      %1357 = vmatpush1.msra.mxu0 0.0
      %1358 = vmatprep.subr.mxu0 0.0
      %1359 = vmatpush1.msra.mxu0 0.0
      %1360 = vmatprep.subr.mxu0 0.0
      %1361 = vmatpush1.msra.mxu0 0.0
      %1362 = vmatprep.subr.mxu0 0.0
      %1363 = vmatpush1.msra.mxu0 0.0
      %1364 = vmatprep.subr.mxu0 0.0
      %1365 = vmatpush1.msra.mxu0 0.0
      %1366 = vmatprep.mubr.f32.mxu0 0.0
      %1367 = vmatmul.mubr.f32.gmra.mrb[0].mxu0 %v1276
      %v1368 = vpop.f32.mrb[0].mxu0
      %v1369 = vadd.f32 0.0, %v1368
      %v1370 = vpop.f32.mrb[0].mxu0
      %1371 = vmatprep.mubr.f32.mxu0 0.0
      %1372 = vmatmul.mubr.f32.gmra.mrb[0].mxu0 %v1279
      %v1373 = vpop.f32.mrb[0].mxu0
      %v1374 = vadd.f32 0.0, %v1373
      %v1375 = vpop.f32.mrb[0].mxu0
      %1376 = vmatprep.mubr.f32.mxu0 0.0
      %1377 = vmatmul.mubr.f32.gmra.mrb[0].mxu0 %v1282
      %v1378 = vpop.f32.mrb[0].mxu0
      %v1379 = vadd.f32 0.0, %v1378
      %v1380 = vpop.f32.mrb[0].mxu0
      %1381 = vmatprep.mubr.f32.mxu0 0.0
      %1382 = vmatmul.mubr.f32.gmra.mrb[0].mxu0 %v1285
      %v1383 = vpop.f32.mrb[0].mxu0
      %v1384 = vadd.f32 0.0, %v1383
      %v1385 = vpop.f32.mrb[0].mxu0
      %1386 = vmatprep.mubr.f32.mxu0 0.0
      %1387 = vmatmul.mubr.f32.gmra.mrb[0].mxu0 %v1288
      %v1388 = vpop.f32.mrb[0].mxu0
      %v1389 = vadd.f32 0.0, %v1388
      %v1390 = vpop.f32.mrb[0].mxu0
      %1391 = vmatprep.mubr.f32.mxu0 0.0
      %1392 = vmatmul.mubr.f32.gmra.mrb[0].mxu0 %v1291
      %v1393 = vpop.f32.mrb[0].mxu0
      %v1394 = vadd.f32 0.0, %v1393
      %v1395 = vpop.f32.mrb[0].mxu0
      %1396 = vmatprep.mubr.f32.mxu0 0.0
      %1397 = vmatmul.mubr.f32.gmra.mrb[0].mxu0 %v1294
      %v1398 = vpop.f32.mrb[0].mxu0
      %v1399 = vadd.f32 0.0, %v1398
      %v1400 = vpop.f32.mrb[0].mxu0
      %1401 = vmatprep.mubr.f32.mxu0 0.0
      %1402 = vmatmul.mubr.f32.gmra.mrb[0].mxu0 %v1297
      %v1403 = vpop.f32.mrb[0].mxu0
      %v1404 = vadd.f32 0.0, %v1403
      %v1405 = vpop.f32.mrb[0].mxu0
      %1406 = vdwg.mxu0
      %v1407 = vmul.f32 %v1369, 0.17407766
      %v1408 = vmul.f32 %v1374, 0.17407766
      %v1409 = vmul.f32 %v1379, 0.17407766
      %v1410 = vmul.f32 %v1384, 0.17407766
      %v1411 = vmul.f32 %v1389, 0.17407766
      %v1412 = vmul.f32 %v1394, 0.17407766
      %v1413 = vmul.f32 %v1399, 0.17407766
      %v1414 = vmul.f32 %v1404, 0.17407766
      %v1415 = vld [vmem:[%s9] sm:$0xff]
      %v1416 = vld [vmem:[%s9 + $0x8] sm:$0xff]
      %v1417 = vld [vmem:[%s9 + $0x10] sm:$0xff]
      %v1418 = vld [vmem:[%s9 + $0x18] sm:$0xff]
      %v1419 = vld [vmem:[%s9 + $0x20] sm:$0xff]
      %v1420 = vld [vmem:[%s9 + $0x28] sm:$0xff]
      %v1421 = vld [vmem:[%s9 + $0x30] sm:$0xff]
      %v1422 = vld [vmem:[%s9 + $0x38] sm:$0xff]
      %v1423 = vadd.f32 %v1407, %v1415
      %v1424 = vadd.f32 %v1408, %v1416
      %v1425 = vadd.f32 %v1409, %v1417
      %v1426 = vadd.f32 %v1410, %v1418
      %v1427 = vadd.f32 %v1411, %v1419
      %v1428 = vadd.f32 %v1412, %v1420
      %v1429 = vadd.f32 %v1413, %v1421
      %v1430 = vadd.f32 %v1414, %v1422
      %v1431 = vsel %vm385, %v1423, -inf
      %1432 = vmax.xlane.f32.xlu0 %v1431
      %v1433 = vpop.xlane.xlu0 %1432
      %v1434 = vsel %vm385, %v1424, -inf
      %1435 = vmax.xlane.f32.xlu0 %v1434
      %v1436 = vpop.xlane.xlu0 %1435
      %v1437 = vsel %vm385, %v1425, -inf
      %1438 = vmax.xlane.f32.xlu0 %v1437
      %v1439 = vpop.xlane.xlu0 %1438
      %v1440 = vsel %vm385, %v1426, -inf
      %1441 = vmax.xlane.f32.xlu0 %v1440
      %v1442 = vpop.xlane.xlu0 %1441
      %v1443 = vsel %vm385, %v1427, -inf
      %1444 = vmax.xlane.f32.xlu0 %v1443
      %v1445 = vpop.xlane.xlu0 %1444
      %v1446 = vsel %vm385, %v1428, -inf
      %1447 = vmax.xlane.f32.xlu0 %v1446
      %v1448 = vpop.xlane.xlu0 %1447
      %v1449 = vsel %vm385, %v1429, -inf
      %1450 = vmax.xlane.f32.xlu0 %v1449
      %v1451 = vpop.xlane.xlu0 %1450
      %v1452 = vsel %vm385, %v1430, -inf
      %1453 = vmax.xlane.f32.xlu0 %v1452
      %v1454 = vpop.xlane.xlu0 %1453
      %v1455 = vsub.f32 %v1423, %v1433
      %v1456 = vsub.f32 %v1424, %v1436
      %v1457 = vsub.f32 %v1425, %v1439
      %v1458 = vsub.f32 %v1426, %v1442
      %v1459 = vsub.f32 %v1427, %v1445
      %v1460 = vsub.f32 %v1428, %v1448
      %v1461 = vsub.f32 %v1429, %v1451
      %v1462 = vsub.f32 %v1430, %v1454
      %v1463 = vmul.f32 %v1455, 1.442695
      %v1464 = vpow.pop %v1463
      %v1465 = vmul.f32 %v1456, 1.442695
      %v1466 = vpow.pop %v1465
      %v1467 = vmul.f32 %v1457, 1.442695
      %v1468 = vpow.pop %v1467
      %v1469 = vmul.f32 %v1458, 1.442695
      %v1470 = vpow.pop %v1469
      %v1471 = vmul.f32 %v1459, 1.442695
      %v1472 = vpow.pop %v1471
      %v1473 = vmul.f32 %v1460, 1.442695
      %v1474 = vpow.pop %v1473
      %v1475 = vmul.f32 %v1461, 1.442695
      %v1476 = vpow.pop %v1475
      %v1477 = vmul.f32 %v1462, 1.442695
      %v1478 = vpow.pop %v1477
      %v1479 = vsel %vm385, %v1464, 0.0
      %1480 = vadd.xlane.f32.xlu0 %v1479
      %v1481 = vpop.xlane.xlu0 %1480
      %v1482 = vsel %vm385, %v1466, 0.0
      %1483 = vadd.xlane.f32.xlu0 %v1482
      %v1484 = vpop.xlane.xlu0 %1483
      %v1485 = vsel %vm385, %v1468, 0.0
      %1486 = vadd.xlane.f32.xlu0 %v1485
      %v1487 = vpop.xlane.xlu0 %1486
      %v1488 = vsel %vm385, %v1470, 0.0
      %1489 = vadd.xlane.f32.xlu0 %v1488
      %v1490 = vpop.xlane.xlu0 %1489
      %v1491 = vsel %vm385, %v1472, 0.0
      %1492 = vadd.xlane.f32.xlu0 %v1491
      %v1493 = vpop.xlane.xlu0 %1492
      %v1494 = vsel %vm385, %v1474, 0.0
      %1495 = vadd.xlane.f32.xlu0 %v1494
      %v1496 = vpop.xlane.xlu0 %1495
      %v1497 = vsel %vm385, %v1476, 0.0
      %1498 = vadd.xlane.f32.xlu0 %v1497
      %v1499 = vpop.xlane.xlu0 %1498
      %v1500 = vsel %vm385, %v1478, 0.0
      %1501 = vadd.xlane.f32.xlu0 %v1500
      %v1502 = vpop.xlane.xlu0 %1501
      %v1503 = vrcp.pop %v1481
      %v1504 = vrcp.pop %v1484
      %v1505 = vrcp.pop %v1487
      %v1506 = vrcp.pop %v1490
      %v1507 = vrcp.pop %v1493
      %v1508 = vrcp.pop %v1496
      %v1509 = vrcp.pop %v1499
      %v1510 = vrcp.pop %v1502
      %v1511 = vmul.f32 %v1464, %v1503
      %v1512 = vmul.f32 %v1466, %v1504
      %v1513 = vmul.f32 %v1468, %v1505
      %v1514 = vmul.f32 %v1470, %v1506
      %v1515 = vmul.f32 %v1472, %v1507
      %v1516 = vmul.f32 %v1474, %v1508
      %v1517 = vmul.f32 %v1476, %v1509
      %v1518 = vmul.f32 %v1478, %v1510
      %v1520 = vsel %vm385, %v1156, 0
      %v1523 = vsel %vm385, %v1161, 0
      %v1526 = vsel %vm385, %v1166, 0
      %v1529 = vsel %vm385, %v1171, 0
      %v1532 = vsel %vm385, %v1176, 0
      %v1535 = vsel %vm385, %v1181, 0
      %v1538 = vsel %vm385, %v1186, 0
      %v1541 = vsel %vm385, %v1191, 0
      %v1544 = vsel %vm385, %v1196, 0
      %v1547 = vsel %vm385, %v1201, 0
      %v1550 = vsel %vm385, %v1206, 0
      %v1553 = vsel %vm385, %v1211, 0
      %v1556 = vsel %vm385, %v1216, 0
      %v1559 = vsel %vm385, %v1221, 0
      %v1562 = vsel %vm385, %v1226, 0
      %v1565 = vsel %vm385, %v1231, 0
      %v1568 = vsel %vm385, %v1236, 0
      %v1571 = vsel %vm385, %v1511, 0
      %v1574 = vsel %vm385, %v1512, 0
      %v1577 = vsel %vm385, %v1513, 0
      %v1580 = vsel %vm385, %v1514, 0
      %v1583 = vsel %vm385, %v1515, 0
      %v1586 = vsel %vm385, %v1516, 0
      %v1589 = vsel %vm385, %v1517, 0
      %v1592 = vsel %vm385, %v1518, 0
      %1594 = vmatprep.subr.mxu0 0.0
      %1595 = vmatpush1.xpose.msra.mxu0 %v1571
      %1596 = vmatprep.subr.mxu0 0.0
      %1597 = vmatpush1.xpose.msra.mxu0 %v1574
      %1598 = vmatprep.subr.mxu0 0.0
      %1599 = vmatpush1.xpose.msra.mxu0 %v1577
      %1600 = vmatprep.subr.mxu0 0.0
      %1601 = vmatpush1.xpose.msra.mxu0 %v1580
      %1602 = vmatprep.subr.mxu0 0.0
      %1603 = vmatpush1.xpose.msra.mxu0 %v1583
      %1604 = vmatprep.subr.mxu0 0.0
      %1605 = vmatpush1.xpose.msra.mxu0 %v1586
      %1606 = vmatprep.subr.mxu0 0.0
      %1607 = vmatpush1.xpose.msra.mxu0 %v1589
      %1608 = vmatprep.subr.mxu0 0.0
      %1609 = vmatpush1.xpose.msra.mxu0 %v1592
      %1610 = vmatprep.subr.mxu0 0.0
      %1611 = vmatpush1.xpose.msra.mxu0 0.0
      %1612 = vmatprep.subr.mxu0 0.0
      %1613 = vmatpush1.xpose.msra.mxu0 0.0
      %1614 = vmatprep.subr.mxu0 0.0
      %1615 = vmatpush1.xpose.msra.mxu0 0.0
      %1616 = vmatprep.subr.mxu0 0.0
      %1617 = vmatpush1.xpose.msra.mxu0 0.0
      %1618 = vmatprep.subr.mxu0 0.0
      %1619 = vmatpush1.xpose.msra.mxu0 0.0
      %1620 = vmatprep.subr.mxu0 0.0
      %1621 = vmatpush1.xpose.msra.mxu0 0.0
      %1622 = vmatprep.subr.mxu0 0.0
      %1623 = vmatpush1.xpose.msra.mxu0 0.0
      %1624 = vmatprep.subr.mxu0 0.0
      %1625 = vmatpush1.xpose.msra.mxu0 0.0
      %1626 = vmatprep.subr.mxu0 0.0
      %1627 = vmatpush1.xpose.msra.mxu0 0.0
      %1628 = vmatprep.subr.mxu0 0.0
      %1629 = vmatpush1.xpose.msra.mxu0 0.0
      %1630 = vmatprep.subr.mxu0 0.0
      %1631 = vmatpush1.xpose.msra.mxu0 0.0
      %1632 = vmatprep.subr.mxu0 0.0
      %1633 = vmatpush1.xpose.msra.mxu0 0.0
      %1634 = vmatprep.subr.mxu0 0.0
      %1635 = vmatpush1.xpose.msra.mxu0 0.0
      %1636 = vmatprep.subr.mxu0 0.0
      %1637 = vmatpush1.xpose.msra.mxu0 0.0
      %1638 = vmatprep.subr.mxu0 0.0
      %1639 = vmatpush1.xpose.msra.mxu0 0.0
      %1640 = vmatprep.subr.mxu0 0.0
      %1641 = vmatpush1.xpose.msra.mxu0 0.0
      %1642 = vmatprep.subr.mxu0 0.0
      %1643 = vmatpush1.xpose.msra.mxu0 0.0
      %1644 = vmatprep.subr.mxu0 0.0
      %1645 = vmatpush1.xpose.msra.mxu0 0.0
      %1646 = vmatprep.subr.mxu0 0.0
      %1647 = vmatpush1.xpose.msra.mxu0 0.0
      %1648 = vmatprep.subr.mxu0 0.0
      %1649 = vmatpush1.xpose.msra.mxu0 0.0
      %1650 = vmatprep.subr.mxu0 0.0
      %1651 = vmatpush1.xpose.msra.mxu0 0.0
      %1652 = vmatprep.subr.mxu0 0.0
      %1653 = vmatpush1.xpose.msra.mxu0 0.0
      %1654 = vmatprep.subr.mxu0 0.0
      %1655 = vmatpush1.xpose.msra.mxu0 0.0
      %1656 = vmatprep.subr.mxu0 0.0
      %1657 = vmatpush1.xpose.msra.mxu0 0.0
      %1658 = vmatprep.mubr.f32.mxu0 0.0
      %1659 = vmatmul.mubr.f32.gmra.mrb[0].mxu0 %v1520
      %v1660 = vpop.f32.mrb[0].mxu0
      %v1661 = vadd.f32 0.0, %v1660
      %v1662 = vpop.f32.mrb[0].mxu0
      %1663 = vmatprep.mubr.f32.mxu0 0.0
      %1664 = vmatmul.mubr.f32.gmra.mrb[0].mxu0 %v1523
      %v1665 = vpop.f32.mrb[0].mxu0
      %v1666 = vadd.f32 0.0, %v1665
      %v1667 = vpop.f32.mrb[0].mxu0
      %1668 = vmatprep.mubr.f32.mxu0 0.0
      %1669 = vmatmul.mubr.f32.gmra.mrb[0].mxu0 %v1526
      %v1670 = vpop.f32.mrb[0].mxu0
      %v1671 = vadd.f32 0.0, %v1670
      %v1672 = vpop.f32.mrb[0].mxu0
      %1673 = vmatprep.mubr.f32.mxu0 0.0
      %1674 = vmatmul.mubr.f32.gmra.mrb[0].mxu0 %v1529
      %v1675 = vpop.f32.mrb[0].mxu0
      %v1676 = vadd.f32 0.0, %v1675
      %v1677 = vpop.f32.mrb[0].mxu0
      %1678 = vmatprep.mubr.f32.mxu0 0.0
      %1679 = vmatmul.mubr.f32.gmra.mrb[0].mxu0 %v1532
      %v1680 = vpop.f32.mrb[0].mxu0
      %v1681 = vadd.f32 0.0, %v1680
      %v1682 = vpop.f32.mrb[0].mxu0
      %1683 = vmatprep.mubr.f32.mxu0 0.0
      %1684 = vmatmul.mubr.f32.gmra.mrb[0].mxu0 %v1535
      %v1685 = vpop.f32.mrb[0].mxu0
      %v1686 = vadd.f32 0.0, %v1685
      %v1687 = vpop.f32.mrb[0].mxu0
      %1688 = vmatprep.mubr.f32.mxu0 0.0
      %1689 = vmatmul.mubr.f32.gmra.mrb[0].mxu0 %v1538
      %v1690 = vpop.f32.mrb[0].mxu0
      %v1691 = vadd.f32 0.0, %v1690
      %v1692 = vpop.f32.mrb[0].mxu0
      %1693 = vmatprep.mubr.f32.mxu0 0.0
      %1694 = vmatmul.mubr.f32.gmra.mrb[0].mxu0 %v1541
      %v1695 = vpop.f32.mrb[0].mxu0
      %v1696 = vadd.f32 0.0, %v1695
      %v1697 = vpop.f32.mrb[0].mxu0
      %1698 = vmatprep.mubr.f32.mxu0 0.0
      %1699 = vmatmul.mubr.f32.gmra.mrb[0].mxu0 %v1544
      %v1700 = vpop.f32.mrb[0].mxu0
      %v1701 = vadd.f32 0.0, %v1700
      %v1702 = vpop.f32.mrb[0].mxu0
      %1703 = vmatprep.mubr.f32.mxu0 0.0
      %1704 = vmatmul.mubr.f32.gmra.mrb[0].mxu0 %v1547
      %v1705 = vpop.f32.mrb[0].mxu0
      %v1706 = vadd.f32 0.0, %v1705
      %v1707 = vpop.f32.mrb[0].mxu0
      %1708 = vmatprep.mubr.f32.mxu0 0.0
      %1709 = vmatmul.mubr.f32.gmra.mrb[0].mxu0 %v1550
      %v1710 = vpop.f32.mrb[0].mxu0
      %v1711 = vadd.f32 0.0, %v1710
      %v1712 = vpop.f32.mrb[0].mxu0
      %1713 = vmatprep.mubr.f32.mxu0 0.0
      %1714 = vmatmul.mubr.f32.gmra.mrb[0].mxu0 %v1553
      %v1715 = vpop.f32.mrb[0].mxu0
      %v1716 = vadd.f32 0.0, %v1715
      %v1717 = vpop.f32.mrb[0].mxu0
      %1718 = vmatprep.mubr.f32.mxu0 0.0
      %1719 = vmatmul.mubr.f32.gmra.mrb[0].mxu0 %v1556
      %v1720 = vpop.f32.mrb[0].mxu0
      %v1721 = vadd.f32 0.0, %v1720
      %v1722 = vpop.f32.mrb[0].mxu0
      %1723 = vmatprep.mubr.f32.mxu0 0.0
      %1724 = vmatmul.mubr.f32.gmra.mrb[0].mxu0 %v1559
      %v1725 = vpop.f32.mrb[0].mxu0
      %v1726 = vadd.f32 0.0, %v1725
      %v1727 = vpop.f32.mrb[0].mxu0
      %1728 = vmatprep.mubr.f32.mxu0 0.0
      %1729 = vmatmul.mubr.f32.gmra.mrb[0].mxu0 %v1562
      %v1730 = vpop.f32.mrb[0].mxu0
      %v1731 = vadd.f32 0.0, %v1730
      %v1732 = vpop.f32.mrb[0].mxu0
      %1733 = vmatprep.mubr.f32.mxu0 0.0
      %1734 = vmatmul.mubr.f32.gmra.mrb[0].mxu0 %v1565
      %v1735 = vpop.f32.mrb[0].mxu0
      %v1736 = vadd.f32 0.0, %v1735
      %v1737 = vpop.f32.mrb[0].mxu0
      %1738 = vmatprep.mubr.f32.mxu0 0.0
      %1739 = vmatmul.mubr.f32.gmra.mrb[0].mxu0 %v1568
      %v1740 = vpop.f32.mrb[0].mxu0
      %v1741 = vadd.f32 0.0, %v1740
      %v1742 = vpop.f32.mrb[0].mxu0
      %1743 = vdwg.mxu0
      %v1745 = vsel %vm385, %v1661, 0
      %v1748 = vsel %vm385, %v1666, 0
      %v1751 = vsel %vm385, %v1671, 0
      %v1754 = vsel %vm385, %v1676, 0
      %v1757 = vsel %vm385, %v1681, 0
      %v1760 = vsel %vm385, %v1686, 0
      %v1763 = vsel %vm385, %v1691, 0
      %v1766 = vsel %vm385, %v1696, 0
      %v1769 = vsel %vm385, %v1701, 0
      %v1772 = vsel %vm385, %v1706, 0
      %v1775 = vsel %vm385, %v1711, 0
      %v1778 = vsel %vm385, %v1716, 0
      %v1781 = vsel %vm385, %v1721, 0
      %v1784 = vsel %vm385, %v1726, 0
      %v1787 = vsel %vm385, %v1731, 0
      %v1790 = vsel %vm385, %v1736, 0
      %v1793 = vsel %vm385, %v1741, 0
      %1795 = vmatprep.subr.mxu0 0.0
      %1796 = vmatpush1.msra.mxu0 %v377
      %1797 = vmatprep.subr.mxu0 0.0
      %1798 = vmatpush1.msra.mxu0 %v378
      %1799 = vmatprep.subr.mxu0 0.0
      %1800 = vmatpush1.msra.mxu0 %v379
      %1801 = vmatprep.subr.mxu0 0.0
      %1802 = vmatpush1.msra.mxu0 %v380
      %1803 = vmatprep.subr.mxu0 0.0
      %1804 = vmatpush1.msra.mxu0 %v381
      %1805 = vmatprep.subr.mxu0 0.0
      %1806 = vmatpush1.msra.mxu0 %v382
      %1807 = vmatprep.subr.mxu0 0.0
      %1808 = vmatpush1.msra.mxu0 %v383
      %1809 = vmatprep.subr.mxu0 0.0
      %1810 = vmatpush1.msra.mxu0 %v384
      %1811 = vmatprep.subr.mxu0 0.0
      %1812 = vmatpush1.msra.mxu0 0.0
      %1813 = vmatprep.subr.mxu0 0.0
      %1814 = vmatpush1.msra.mxu0 0.0
      %1815 = vmatprep.subr.mxu0 0.0
      %1816 = vmatpush1.msra.mxu0 0.0
      %1817 = vmatprep.subr.mxu0 0.0
      %1818 = vmatpush1.msra.mxu0 0.0
      %1819 = vmatprep.subr.mxu0 0.0
      %1820 = vmatpush1.msra.mxu0 0.0
      %1821 = vmatprep.subr.mxu0 0.0
      %1822 = vmatpush1.msra.mxu0 0.0
      %1823 = vmatprep.subr.mxu0 0.0
      %1824 = vmatpush1.msra.mxu0 0.0
      %1825 = vmatprep.subr.mxu0 0.0
      %1826 = vmatpush1.msra.mxu0 0.0
      %1827 = vmatprep.subr.mxu0 0.0
      %1828 = vmatpush1.msra.mxu0 0.0
      %1829 = vmatprep.subr.mxu0 0.0
      %1830 = vmatpush1.msra.mxu0 0.0
      %1831 = vmatprep.subr.mxu0 0.0
      %1832 = vmatpush1.msra.mxu0 0.0
      %1833 = vmatprep.subr.mxu0 0.0
      %1834 = vmatpush1.msra.mxu0 0.0
      %1835 = vmatprep.subr.mxu0 0.0
      %1836 = vmatpush1.msra.mxu0 0.0
      %1837 = vmatprep.subr.mxu0 0.0
      %1838 = vmatpush1.msra.mxu0 0.0
      %1839 = vmatprep.subr.mxu0 0.0
      %1840 = vmatpush1.msra.mxu0 0.0
      %1841 = vmatprep.subr.mxu0 0.0
      %1842 = vmatpush1.msra.mxu0 0.0
      %1843 = vmatprep.subr.mxu0 0.0
      %1844 = vmatpush1.msra.mxu0 0.0
      %1845 = vmatprep.subr.mxu0 0.0
      %1846 = vmatpush1.msra.mxu0 0.0
      %1847 = vmatprep.subr.mxu0 0.0
      %1848 = vmatpush1.msra.mxu0 0.0
      %1849 = vmatprep.subr.mxu0 0.0
      %1850 = vmatpush1.msra.mxu0 0.0
      %1851 = vmatprep.subr.mxu0 0.0
      %1852 = vmatpush1.msra.mxu0 0.0
      %1853 = vmatprep.subr.mxu0 0.0
      %1854 = vmatpush1.msra.mxu0 0.0
      %1855 = vmatprep.subr.mxu0 0.0
      %1856 = vmatpush1.msra.mxu0 0.0
      %1857 = vmatprep.subr.mxu0 0.0
      %1858 = vmatpush1.msra.mxu0 0.0
      %1859 = vmatprep.mubr.f32.mxu0 0.0
      %1860 = vmatmul.mubr.f32.gmra.mrb[0].mxu0 %v1745
      %v1861 = vpop.f32.mrb[0].mxu0
      %v1862 = vadd.f32 0.0, %v1861
      %v1863 = vpop.f32.mrb[0].mxu0
      %1864 = vmatprep.mubr.f32.mxu0 0.0
      %1865 = vmatmul.mubr.f32.gmra.mrb[0].mxu0 %v1748
      %v1866 = vpop.f32.mrb[0].mxu0
      %v1867 = vadd.f32 0.0, %v1866
      %v1868 = vpop.f32.mrb[0].mxu0
      %1869 = vmatprep.mubr.f32.mxu0 0.0
      %1870 = vmatmul.mubr.f32.gmra.mrb[0].mxu0 %v1751
      %v1871 = vpop.f32.mrb[0].mxu0
      %v1872 = vadd.f32 0.0, %v1871
      %v1873 = vpop.f32.mrb[0].mxu0
      %1874 = vmatprep.mubr.f32.mxu0 0.0
      %1875 = vmatmul.mubr.f32.gmra.mrb[0].mxu0 %v1754
      %v1876 = vpop.f32.mrb[0].mxu0
      %v1877 = vadd.f32 0.0, %v1876
      %v1878 = vpop.f32.mrb[0].mxu0
      %1879 = vmatprep.mubr.f32.mxu0 0.0
      %1880 = vmatmul.mubr.f32.gmra.mrb[0].mxu0 %v1757
      %v1881 = vpop.f32.mrb[0].mxu0
      %v1882 = vadd.f32 0.0, %v1881
      %v1883 = vpop.f32.mrb[0].mxu0
      %1884 = vmatprep.mubr.f32.mxu0 0.0
      %1885 = vmatmul.mubr.f32.gmra.mrb[0].mxu0 %v1760
      %v1886 = vpop.f32.mrb[0].mxu0
      %v1887 = vadd.f32 0.0, %v1886
      %v1888 = vpop.f32.mrb[0].mxu0
      %1889 = vmatprep.mubr.f32.mxu0 0.0
      %1890 = vmatmul.mubr.f32.gmra.mrb[0].mxu0 %v1763
      %v1891 = vpop.f32.mrb[0].mxu0
      %v1892 = vadd.f32 0.0, %v1891
      %v1893 = vpop.f32.mrb[0].mxu0
      %1894 = vmatprep.mubr.f32.mxu0 0.0
      %1895 = vmatmul.mubr.f32.gmra.mrb[0].mxu0 %v1766
      %v1896 = vpop.f32.mrb[0].mxu0
      %v1897 = vadd.f32 0.0, %v1896
      %v1898 = vpop.f32.mrb[0].mxu0
      %1899 = vmatprep.mubr.f32.mxu0 0.0
      %1900 = vmatmul.mubr.f32.gmra.mrb[0].mxu0 %v1769
      %v1901 = vpop.f32.mrb[0].mxu0
      %v1902 = vadd.f32 0.0, %v1901
      %v1903 = vpop.f32.mrb[0].mxu0
      %1904 = vmatprep.mubr.f32.mxu0 0.0
      %1905 = vmatmul.mubr.f32.gmra.mrb[0].mxu0 %v1772
      %v1906 = vpop.f32.mrb[0].mxu0
      %v1907 = vadd.f32 0.0, %v1906
      %v1908 = vpop.f32.mrb[0].mxu0
      %1909 = vmatprep.mubr.f32.mxu0 0.0
      %1910 = vmatmul.mubr.f32.gmra.mrb[0].mxu0 %v1775
      %v1911 = vpop.f32.mrb[0].mxu0
      %v1912 = vadd.f32 0.0, %v1911
      %v1913 = vpop.f32.mrb[0].mxu0
      %1914 = vmatprep.mubr.f32.mxu0 0.0
      %1915 = vmatmul.mubr.f32.gmra.mrb[0].mxu0 %v1778
      %v1916 = vpop.f32.mrb[0].mxu0
      %v1917 = vadd.f32 0.0, %v1916
      %v1918 = vpop.f32.mrb[0].mxu0
      %1919 = vmatprep.mubr.f32.mxu0 0.0
      %1920 = vmatmul.mubr.f32.gmra.mrb[0].mxu0 %v1781
      %v1921 = vpop.f32.mrb[0].mxu0
      %v1922 = vadd.f32 0.0, %v1921
      %v1923 = vpop.f32.mrb[0].mxu0
      %1924 = vmatprep.mubr.f32.mxu0 0.0
      %1925 = vmatmul.mubr.f32.gmra.mrb[0].mxu0 %v1784
      %v1926 = vpop.f32.mrb[0].mxu0
      %v1927 = vadd.f32 0.0, %v1926
      %v1928 = vpop.f32.mrb[0].mxu0
      %1929 = vmatprep.mubr.f32.mxu0 0.0
      %1930 = vmatmul.mubr.f32.gmra.mrb[0].mxu0 %v1787
      %v1931 = vpop.f32.mrb[0].mxu0
      %v1932 = vadd.f32 0.0, %v1931
      %v1933 = vpop.f32.mrb[0].mxu0
      %1934 = vmatprep.mubr.f32.mxu0 0.0
      %1935 = vmatmul.mubr.f32.gmra.mrb[0].mxu0 %v1790
      %v1936 = vpop.f32.mrb[0].mxu0
      %v1937 = vadd.f32 0.0, %v1936
      %v1938 = vpop.f32.mrb[0].mxu0
      %1939 = vmatprep.mubr.f32.mxu0 0.0
      %1940 = vmatmul.mubr.f32.gmra.mrb[0].mxu0 %v1793
      %v1941 = vpop.f32.mrb[0].mxu0
      %v1942 = vadd.f32 0.0, %v1941
      %v1943 = vpop.f32.mrb[0].mxu0
      %1944 = vdwg.mxu0
      %v1945 = vsub.f32 %v1661, %v1862
      %v1946 = vsub.f32 %v1666, %v1867
      %v1947 = vsub.f32 %v1671, %v1872
      %v1948 = vsub.f32 %v1676, %v1877
      %v1949 = vsub.f32 %v1681, %v1882
      %v1950 = vsub.f32 %v1686, %v1887
      %v1951 = vsub.f32 %v1691, %v1892
      %v1952 = vsub.f32 %v1696, %v1897
      %v1953 = vsub.f32 %v1701, %v1902
      %v1954 = vsub.f32 %v1706, %v1907
      %v1955 = vsub.f32 %v1711, %v1912
      %v1956 = vsub.f32 %v1716, %v1917
      %v1957 = vsub.f32 %v1721, %v1922
      %v1958 = vsub.f32 %v1726, %v1927
      %v1959 = vsub.f32 %v1731, %v1932
      %v1960 = vsub.f32 %v1736, %v1937
      %v1961 = vsub.f32 %v1741, %v1942
      %v1962 = vmul.f32 %v1945, %v1945
      %v1963 = vmul.f32 %v1946, %v1946
      %v1964 = vmul.f32 %v1947, %v1947
      %v1965 = vmul.f32 %v1948, %v1948
      %v1966 = vmul.f32 %v1949, %v1949
      %v1967 = vmul.f32 %v1950, %v1950
      %v1968 = vmul.f32 %v1951, %v1951
      %v1969 = vmul.f32 %v1952, %v1952
      %v1970 = vmul.f32 %v1953, %v1953
      %v1971 = vmul.f32 %v1954, %v1954
      %v1972 = vmul.f32 %v1955, %v1955
      %v1973 = vmul.f32 %v1956, %v1956
      %v1974 = vmul.f32 %v1957, %v1957
      %v1975 = vmul.f32 %v1958, %v1958
      %v1976 = vmul.f32 %v1959, %v1959
      %v1977 = vmul.f32 %v1960, %v1960
      %v1978 = vmul.f32 %v1961, %v1961
      %v1980 = vsel %vm385, %v1962, 0
      %v1983 = vsel %vm385, %v1963, 0
      %v1986 = vsel %vm385, %v1964, 0
      %v1989 = vsel %vm385, %v1965, 0
      %v1992 = vsel %vm385, %v1966, 0
      %v1995 = vsel %vm385, %v1967, 0
      %v1998 = vsel %vm385, %v1968, 0
      %v2001 = vsel %vm385, %v1969, 0
      %v2004 = vsel %vm385, %v1970, 0
      %v2007 = vsel %vm385, %v1971, 0
      %v2010 = vsel %vm385, %v1972, 0
      %v2013 = vsel %vm385, %v1973, 0
      %v2016 = vsel %vm385, %v1974, 0
      %v2019 = vsel %vm385, %v1975, 0
      %v2022 = vsel %vm385, %v1976, 0
      %v2025 = vsel %vm385, %v1977, 0
      %v2028 = vsel %vm385, %v1978, 0
      %2030 = vmatprep.subr.mxu0 0.0
      %2031 = vmatpush1.msra.mxu0 %v377
      %2032 = vmatprep.subr.mxu0 0.0
      %2033 = vmatpush1.msra.mxu0 %v378
      %2034 = vmatprep.subr.mxu0 0.0
      %2035 = vmatpush1.msra.mxu0 %v379
      %2036 = vmatprep.subr.mxu0 0.0
      %2037 = vmatpush1.msra.mxu0 %v380
      %2038 = vmatprep.subr.mxu0 0.0
      %2039 = vmatpush1.msra.mxu0 %v381
      %2040 = vmatprep.subr.mxu0 0.0
      %2041 = vmatpush1.msra.mxu0 %v382
      %2042 = vmatprep.subr.mxu0 0.0
      %2043 = vmatpush1.msra.mxu0 %v383
      %2044 = vmatprep.subr.mxu0 0.0
      %2045 = vmatpush1.msra.mxu0 %v384
      %2046 = vmatprep.subr.mxu0 0.0
      %2047 = vmatpush1.msra.mxu0 0.0
      %2048 = vmatprep.subr.mxu0 0.0
      %2049 = vmatpush1.msra.mxu0 0.0
      %2050 = vmatprep.subr.mxu0 0.0
      %2051 = vmatpush1.msra.mxu0 0.0
      %2052 = vmatprep.subr.mxu0 0.0
      %2053 = vmatpush1.msra.mxu0 0.0
      %2054 = vmatprep.subr.mxu0 0.0
      %2055 = vmatpush1.msra.mxu0 0.0
      %2056 = vmatprep.subr.mxu0 0.0
      %2057 = vmatpush1.msra.mxu0 0.0
      %2058 = vmatprep.subr.mxu0 0.0
      %2059 = vmatpush1.msra.mxu0 0.0
      %2060 = vmatprep.subr.mxu0 0.0
      %2061 = vmatpush1.msra.mxu0 0.0
      %2062 = vmatprep.subr.mxu0 0.0
      %2063 = vmatpush1.msra.mxu0 0.0
      %2064 = vmatprep.subr.mxu0 0.0
      %2065 = vmatpush1.msra.mxu0 0.0
      %2066 = vmatprep.subr.mxu0 0.0
      %2067 = vmatpush1.msra.mxu0 0.0
      %2068 = vmatprep.subr.mxu0 0.0
      %2069 = vmatpush1.msra.mxu0 0.0
      %2070 = vmatprep.subr.mxu0 0.0
      %2071 = vmatpush1.msra.mxu0 0.0
      %2072 = vmatprep.subr.mxu0 0.0
      %2073 = vmatpush1.msra.mxu0 0.0
      %2074 = vmatprep.subr.mxu0 0.0
      %2075 = vmatpush1.msra.mxu0 0.0
      %2076 = vmatprep.subr.mxu0 0.0
      %2077 = vmatpush1.msra.mxu0 0.0
      %2078 = vmatprep.subr.mxu0 0.0
      %2079 = vmatpush1.msra.mxu0 0.0
      %2080 = vmatprep.subr.mxu0 0.0
      %2081 = vmatpush1.msra.mxu0 0.0
      %2082 = vmatprep.subr.mxu0 0.0
      %2083 = vmatpush1.msra.mxu0 0.0
      %2084 = vmatprep.subr.mxu0 0.0
      %2085 = vmatpush1.msra.mxu0 0.0
      %2086 = vmatprep.subr.mxu0 0.0
      %2087 = vmatpush1.msra.mxu0 0.0
      %2088 = vmatprep.subr.mxu0 0.0
      %2089 = vmatpush1.msra.mxu0 0.0
      %2090 = vmatprep.subr.mxu0 0.0
      %2091 = vmatpush1.msra.mxu0 0.0
      %2092 = vmatprep.subr.mxu0 0.0
      %2093 = vmatpush1.msra.mxu0 0.0
      %2094 = vmatprep.mubr.f32.mxu0 0.0
      %2095 = vmatmul.mubr.f32.gmra.mrb[0].mxu0 %v1980
      %v2096 = vpop.f32.mrb[0].mxu0
      %v2097 = vadd.f32 1e-05, %v2096
      %v2098 = vpop.f32.mrb[0].mxu0
      %2099 = vmatprep.mubr.f32.mxu0 0.0
      %2100 = vmatmul.mubr.f32.gmra.mrb[0].mxu0 %v1983
      %v2101 = vpop.f32.mrb[0].mxu0
      %v2102 = vadd.f32 1e-05, %v2101
      %v2103 = vpop.f32.mrb[0].mxu0
      %2104 = vmatprep.mubr.f32.mxu0 0.0
      %2105 = vmatmul.mubr.f32.gmra.mrb[0].mxu0 %v1986
      %v2106 = vpop.f32.mrb[0].mxu0
      %v2107 = vadd.f32 1e-05, %v2106
      %v2108 = vpop.f32.mrb[0].mxu0
      %2109 = vmatprep.mubr.f32.mxu0 0.0
      %2110 = vmatmul.mubr.f32.gmra.mrb[0].mxu0 %v1989
      %v2111 = vpop.f32.mrb[0].mxu0
      %v2112 = vadd.f32 1e-05, %v2111
      %v2113 = vpop.f32.mrb[0].mxu0
      %2114 = vmatprep.mubr.f32.mxu0 0.0
      %2115 = vmatmul.mubr.f32.gmra.mrb[0].mxu0 %v1992
      %v2116 = vpop.f32.mrb[0].mxu0
      %v2117 = vadd.f32 1e-05, %v2116
      %v2118 = vpop.f32.mrb[0].mxu0
      %2119 = vmatprep.mubr.f32.mxu0 0.0
      %2120 = vmatmul.mubr.f32.gmra.mrb[0].mxu0 %v1995
      %v2121 = vpop.f32.mrb[0].mxu0
      %v2122 = vadd.f32 1e-05, %v2121
      %v2123 = vpop.f32.mrb[0].mxu0
      %2124 = vmatprep.mubr.f32.mxu0 0.0
      %2125 = vmatmul.mubr.f32.gmra.mrb[0].mxu0 %v1998
      %v2126 = vpop.f32.mrb[0].mxu0
      %v2127 = vadd.f32 1e-05, %v2126
      %v2128 = vpop.f32.mrb[0].mxu0
      %2129 = vmatprep.mubr.f32.mxu0 0.0
      %2130 = vmatmul.mubr.f32.gmra.mrb[0].mxu0 %v2001
      %v2131 = vpop.f32.mrb[0].mxu0
      %v2132 = vadd.f32 1e-05, %v2131
      %v2133 = vpop.f32.mrb[0].mxu0
      %2134 = vmatprep.mubr.f32.mxu0 0.0
      %2135 = vmatmul.mubr.f32.gmra.mrb[0].mxu0 %v2004
      %v2136 = vpop.f32.mrb[0].mxu0
      %v2137 = vadd.f32 1e-05, %v2136
      %v2138 = vpop.f32.mrb[0].mxu0
      %2139 = vmatprep.mubr.f32.mxu0 0.0
      %2140 = vmatmul.mubr.f32.gmra.mrb[0].mxu0 %v2007
      %v2141 = vpop.f32.mrb[0].mxu0
      %v2142 = vadd.f32 1e-05, %v2141
      %v2143 = vpop.f32.mrb[0].mxu0
      %2144 = vmatprep.mubr.f32.mxu0 0.0
      %2145 = vmatmul.mubr.f32.gmra.mrb[0].mxu0 %v2010
      %v2146 = vpop.f32.mrb[0].mxu0
      %v2147 = vadd.f32 1e-05, %v2146
      %v2148 = vpop.f32.mrb[0].mxu0
      %2149 = vmatprep.mubr.f32.mxu0 0.0
      %2150 = vmatmul.mubr.f32.gmra.mrb[0].mxu0 %v2013
      %v2151 = vpop.f32.mrb[0].mxu0
      %v2152 = vadd.f32 1e-05, %v2151
      %v2153 = vpop.f32.mrb[0].mxu0
      %2154 = vmatprep.mubr.f32.mxu0 0.0
      %2155 = vmatmul.mubr.f32.gmra.mrb[0].mxu0 %v2016
      %v2156 = vpop.f32.mrb[0].mxu0
      %v2157 = vadd.f32 1e-05, %v2156
      %v2158 = vpop.f32.mrb[0].mxu0
      %2159 = vmatprep.mubr.f32.mxu0 0.0
      %2160 = vmatmul.mubr.f32.gmra.mrb[0].mxu0 %v2019
      %v2161 = vpop.f32.mrb[0].mxu0
      %v2162 = vadd.f32 1e-05, %v2161
      %v2163 = vpop.f32.mrb[0].mxu0
      %2164 = vmatprep.mubr.f32.mxu0 0.0
      %2165 = vmatmul.mubr.f32.gmra.mrb[0].mxu0 %v2022
      %v2166 = vpop.f32.mrb[0].mxu0
      %v2167 = vadd.f32 1e-05, %v2166
      %v2168 = vpop.f32.mrb[0].mxu0
      %2169 = vmatprep.mubr.f32.mxu0 0.0
      %2170 = vmatmul.mubr.f32.gmra.mrb[0].mxu0 %v2025
      %v2171 = vpop.f32.mrb[0].mxu0
      %v2172 = vadd.f32 1e-05, %v2171
      %v2173 = vpop.f32.mrb[0].mxu0
      %2174 = vmatprep.mubr.f32.mxu0 0.0
      %2175 = vmatmul.mubr.f32.gmra.mrb[0].mxu0 %v2028
      %v2176 = vpop.f32.mrb[0].mxu0
      %v2177 = vadd.f32 1e-05, %v2176
      %v2178 = vpop.f32.mrb[0].mxu0
      %2179 = vdwg.mxu0
      %v2180 = vrsqrt.pop %v2097
      %v2181 = vrsqrt.pop %v2102
      %v2182 = vrsqrt.pop %v2107
      %v2183 = vrsqrt.pop %v2112
      %v2184 = vrsqrt.pop %v2117
      %v2185 = vrsqrt.pop %v2122
      %v2186 = vrsqrt.pop %v2127
      %v2187 = vrsqrt.pop %v2132
      %v2188 = vrsqrt.pop %v2137
      %v2189 = vrsqrt.pop %v2142
      %v2190 = vrsqrt.pop %v2147
      %v2191 = vrsqrt.pop %v2152
      %v2192 = vrsqrt.pop %v2157
      %v2193 = vrsqrt.pop %v2162
      %v2194 = vrsqrt.pop %v2167
      %v2195 = vrsqrt.pop %v2172
      %v2196 = vrsqrt.pop %v2177
      %v2197 = vmul.f32 %v1945, %v2180
      %v2198 = vmul.f32 %v1946, %v2181
      %v2199 = vmul.f32 %v1947, %v2182
      %v2200 = vmul.f32 %v1948, %v2183
      %v2201 = vmul.f32 %v1949, %v2184
      %v2202 = vmul.f32 %v1950, %v2185
      %v2203 = vmul.f32 %v1951, %v2186
      %v2204 = vmul.f32 %v1952, %v2187
      %v2205 = vmul.f32 %v1953, %v2188
      %v2206 = vmul.f32 %v1954, %v2189
      %v2207 = vmul.f32 %v1955, %v2190
      %v2208 = vmul.f32 %v1956, %v2191
      %v2209 = vmul.f32 %v1957, %v2192
      %v2210 = vmul.f32 %v1958, %v2193
      %v2211 = vmul.f32 %v1959, %v2194
      %v2212 = vmul.f32 %v1960, %v2195
      %v2213 = vmul.f32 %v1961, %v2196
      %v2214 = vld [vmem:[%s7] sm:$0xff]
      %v2215 = vld [vmem:[%s7 + $0x8] sm:$0xff]
      %v2216 = vld [vmem:[%s7 + $0x10] sm:$0xff]
      %v2217 = vld [vmem:[%s7 + $0x18] sm:$0xff]
      %v2218 = vld [vmem:[%s7 + $0x20] sm:$0xff]
      %v2219 = vld [vmem:[%s7 + $0x28] sm:$0xff]
      %v2220 = vld [vmem:[%s7 + $0x30] sm:$0xff]
      %v2221 = vld [vmem:[%s7 + $0x38] sm:$0xff]
      %v2222 = vld [vmem:[%s8] sm:$0x1]
      %v2224 = vlaneseq
      %v2225 = vshrl.u32 %v2224, 7
      %v2226 = vsub.s32 0, %v2225
      %v2227 = vrot.slane %v2222, %v2226
      %v2230 = vsel %vm385, %v2197, 0
      %v2233 = vsel %vm385, %v2198, 0
      %v2236 = vsel %vm385, %v2199, 0
      %v2239 = vsel %vm385, %v2200, 0
      %v2242 = vsel %vm385, %v2201, 0
      %v2245 = vsel %vm385, %v2202, 0
      %v2248 = vsel %vm385, %v2203, 0
      %v2251 = vsel %vm385, %v2204, 0
      %v2254 = vsel %vm385, %v2205, 0
      %v2257 = vsel %vm385, %v2206, 0
      %v2260 = vsel %vm385, %v2207, 0
      %v2263 = vsel %vm385, %v2208, 0
      %v2266 = vsel %vm385, %v2209, 0
      %v2269 = vsel %vm385, %v2210, 0
      %v2272 = vsel %vm385, %v2211, 0
      %v2275 = vsel %vm385, %v2212, 0
      %v2278 = vsel %vm385, %v2213, 0
      %2280 = vmatprep.subr.mxu0 0.0
      %2281 = vmatpush1.msra.mxu0 %v2214
      %2282 = vmatprep.subr.mxu0 0.0
      %2283 = vmatpush1.msra.mxu0 %v2215
      %2284 = vmatprep.subr.mxu0 0.0
      %2285 = vmatpush1.msra.mxu0 %v2216
      %2286 = vmatprep.subr.mxu0 0.0
      %2287 = vmatpush1.msra.mxu0 %v2217
      %2288 = vmatprep.subr.mxu0 0.0
      %2289 = vmatpush1.msra.mxu0 %v2218
      %2290 = vmatprep.subr.mxu0 0.0
      %2291 = vmatpush1.msra.mxu0 %v2219
      %2292 = vmatprep.subr.mxu0 0.0
      %2293 = vmatpush1.msra.mxu0 %v2220
      %2294 = vmatprep.subr.mxu0 0.0
      %2295 = vmatpush1.msra.mxu0 %v2221
      %2296 = vmatprep.subr.mxu0 0.0
      %2297 = vmatpush1.msra.mxu0 0.0
      %2298 = vmatprep.subr.mxu0 0.0
      %2299 = vmatpush1.msra.mxu0 0.0
      %2300 = vmatprep.subr.mxu0 0.0
      %2301 = vmatpush1.msra.mxu0 0.0
      %2302 = vmatprep.subr.mxu0 0.0
      %2303 = vmatpush1.msra.mxu0 0.0
      %2304 = vmatprep.subr.mxu0 0.0
      %2305 = vmatpush1.msra.mxu0 0.0
      %2306 = vmatprep.subr.mxu0 0.0
      %2307 = vmatpush1.msra.mxu0 0.0
      %2308 = vmatprep.subr.mxu0 0.0
      %2309 = vmatpush1.msra.mxu0 0.0
      %2310 = vmatprep.subr.mxu0 0.0
      %2311 = vmatpush1.msra.mxu0 0.0
      %2312 = vmatprep.subr.mxu0 0.0
      %2313 = vmatpush1.msra.mxu0 0.0
      %2314 = vmatprep.subr.mxu0 0.0
      %2315 = vmatpush1.msra.mxu0 0.0
      %2316 = vmatprep.subr.mxu0 0.0
      %2317 = vmatpush1.msra.mxu0 0.0
      %2318 = vmatprep.subr.mxu0 0.0
      %2319 = vmatpush1.msra.mxu0 0.0
      %2320 = vmatprep.subr.mxu0 0.0
      %2321 = vmatpush1.msra.mxu0 0.0
      %2322 = vmatprep.subr.mxu0 0.0
      %2323 = vmatpush1.msra.mxu0 0.0
      %2324 = vmatprep.subr.mxu0 0.0
      %2325 = vmatpush1.msra.mxu0 0.0
      %2326 = vmatprep.subr.mxu0 0.0
      %2327 = vmatpush1.msra.mxu0 0.0
      %2328 = vmatprep.subr.mxu0 0.0
      %2329 = vmatpush1.msra.mxu0 0.0
      %2330 = vmatprep.subr.mxu0 0.0
      %2331 = vmatpush1.msra.mxu0 0.0
      %2332 = vmatprep.subr.mxu0 0.0
      %2333 = vmatpush1.msra.mxu0 0.0
      %2334 = vmatprep.subr.mxu0 0.0
      %2335 = vmatpush1.msra.mxu0 0.0
      %2336 = vmatprep.subr.mxu0 0.0
      %2337 = vmatpush1.msra.mxu0 0.0
      %2338 = vmatprep.subr.mxu0 0.0
      %2339 = vmatpush1.msra.mxu0 0.0
      %2340 = vmatprep.subr.mxu0 0.0
      %2341 = vmatpush1.msra.mxu0 0.0
      %2342 = vmatprep.subr.mxu0 0.0
      %2343 = vmatpush1.msra.mxu0 0.0
      %2344 = vmatprep.mubr.f32.mxu0 0.0
      %2345 = vmatmul.mubr.f32.gmra.mrb[0].mxu0 %v2230
      %v2346 = vpop.f32.mrb[0].mxu0
      %v2347 = vadd.f32 %v2227, %v2346
      %v2348 = vpop.f32.mrb[0].mxu0
      %2349 = vmatprep.mubr.f32.mxu0 0.0
      %2350 = vmatmul.mubr.f32.gmra.mrb[0].mxu0 %v2233
      %v2351 = vpop.f32.mrb[0].mxu0
      %v2352 = vadd.f32 %v2227, %v2351
      %v2353 = vpop.f32.mrb[0].mxu0
      %2354 = vmatprep.mubr.f32.mxu0 0.0
      %2355 = vmatmul.mubr.f32.gmra.mrb[0].mxu0 %v2236
      %v2356 = vpop.f32.mrb[0].mxu0
      %v2357 = vadd.f32 %v2227, %v2356
      %v2358 = vpop.f32.mrb[0].mxu0
      %2359 = vmatprep.mubr.f32.mxu0 0.0
      %2360 = vmatmul.mubr.f32.gmra.mrb[0].mxu0 %v2239
      %v2361 = vpop.f32.mrb[0].mxu0
      %v2362 = vadd.f32 %v2227, %v2361
      %v2363 = vpop.f32.mrb[0].mxu0
      %2364 = vmatprep.mubr.f32.mxu0 0.0
      %2365 = vmatmul.mubr.f32.gmra.mrb[0].mxu0 %v2242
      %v2366 = vpop.f32.mrb[0].mxu0
      %v2367 = vadd.f32 %v2227, %v2366
      %v2368 = vpop.f32.mrb[0].mxu0
      %2369 = vmatprep.mubr.f32.mxu0 0.0
      %2370 = vmatmul.mubr.f32.gmra.mrb[0].mxu0 %v2245
      %v2371 = vpop.f32.mrb[0].mxu0
      %v2372 = vadd.f32 %v2227, %v2371
      %v2373 = vpop.f32.mrb[0].mxu0
      %2374 = vmatprep.mubr.f32.mxu0 0.0
      %2375 = vmatmul.mubr.f32.gmra.mrb[0].mxu0 %v2248
      %v2376 = vpop.f32.mrb[0].mxu0
      %v2377 = vadd.f32 %v2227, %v2376
      %v2378 = vpop.f32.mrb[0].mxu0
      %2379 = vmatprep.mubr.f32.mxu0 0.0
      %2380 = vmatmul.mubr.f32.gmra.mrb[0].mxu0 %v2251
      %v2381 = vpop.f32.mrb[0].mxu0
      %v2382 = vadd.f32 %v2227, %v2381
      %v2383 = vpop.f32.mrb[0].mxu0
      %2384 = vmatprep.mubr.f32.mxu0 0.0
      %2385 = vmatmul.mubr.f32.gmra.mrb[0].mxu0 %v2254
      %v2386 = vpop.f32.mrb[0].mxu0
      %v2387 = vadd.f32 %v2227, %v2386
      %v2388 = vpop.f32.mrb[0].mxu0
      %2389 = vmatprep.mubr.f32.mxu0 0.0
      %2390 = vmatmul.mubr.f32.gmra.mrb[0].mxu0 %v2257
      %v2391 = vpop.f32.mrb[0].mxu0
      %v2392 = vadd.f32 %v2227, %v2391
      %v2393 = vpop.f32.mrb[0].mxu0
      %2394 = vmatprep.mubr.f32.mxu0 0.0
      %2395 = vmatmul.mubr.f32.gmra.mrb[0].mxu0 %v2260
      %v2396 = vpop.f32.mrb[0].mxu0
      %v2397 = vadd.f32 %v2227, %v2396
      %v2398 = vpop.f32.mrb[0].mxu0
      %2399 = vmatprep.mubr.f32.mxu0 0.0
      %2400 = vmatmul.mubr.f32.gmra.mrb[0].mxu0 %v2263
      %v2401 = vpop.f32.mrb[0].mxu0
      %v2402 = vadd.f32 %v2227, %v2401
      %v2403 = vpop.f32.mrb[0].mxu0
      %2404 = vmatprep.mubr.f32.mxu0 0.0
      %2405 = vmatmul.mubr.f32.gmra.mrb[0].mxu0 %v2266
      %v2406 = vpop.f32.mrb[0].mxu0
      %v2407 = vadd.f32 %v2227, %v2406
      %v2408 = vpop.f32.mrb[0].mxu0
      %2409 = vmatprep.mubr.f32.mxu0 0.0
      %2410 = vmatmul.mubr.f32.gmra.mrb[0].mxu0 %v2269
      %v2411 = vpop.f32.mrb[0].mxu0
      %v2412 = vadd.f32 %v2227, %v2411
      %v2413 = vpop.f32.mrb[0].mxu0
      %2414 = vmatprep.mubr.f32.mxu0 0.0
      %2415 = vmatmul.mubr.f32.gmra.mrb[0].mxu0 %v2272
      %v2416 = vpop.f32.mrb[0].mxu0
      %v2417 = vadd.f32 %v2227, %v2416
      %v2418 = vpop.f32.mrb[0].mxu0
      %2419 = vmatprep.mubr.f32.mxu0 0.0
      %2420 = vmatmul.mubr.f32.gmra.mrb[0].mxu0 %v2275
      %v2421 = vpop.f32.mrb[0].mxu0
      %v2422 = vadd.f32 %v2227, %v2421
      %v2423 = vpop.f32.mrb[0].mxu0
      %2424 = vmatprep.mubr.f32.mxu0 0.0
      %2425 = vmatmul.mubr.f32.gmra.mrb[0].mxu0 %v2278
      %v2426 = vpop.f32.mrb[0].mxu0
      %v2427 = vadd.f32 %v2227, %v2426
      %v2428 = vpop.f32.mrb[0].mxu0
      %2429 = vdwg.mxu0
      %2430 = vst.msk [vmem:[%s359] sm:$0xff] %vm385, %v2347
      %2431 = vst.msk [vmem:[%s359 + $0x8] sm:$0xff] %vm385, %v2352
      %2432 = vst.msk [vmem:[%s359 + $0x10] sm:$0xff] %vm385, %v2357
      %2433 = vst.msk [vmem:[%s359 + $0x18] sm:$0xff] %vm385, %v2362
      %2434 = vst.msk [vmem:[%s359 + $0x20] sm:$0xff] %vm385, %v2367
      %2435 = vst.msk [vmem:[%s359 + $0x28] sm:$0xff] %vm385, %v2372
      %2436 = vst.msk [vmem:[%s359 + $0x30] sm:$0xff] %vm385, %v2377
      %2437 = vst.msk [vmem:[%s359 + $0x38] sm:$0xff] %vm385, %v2382
      %2438 = vst.msk [vmem:[%s359 + $0x40] sm:$0xff] %vm385, %v2387
      %2439 = vst.msk [vmem:[%s359 + $0x48] sm:$0xff] %vm385, %v2392
      %2440 = vst.msk [vmem:[%s359 + $0x50] sm:$0xff] %vm385, %v2397
      %2441 = vst.msk [vmem:[%s359 + $0x58] sm:$0xff] %vm385, %v2402
      %2442 = vst.msk [vmem:[%s359 + $0x60] sm:$0xff] %vm385, %v2407
      %2443 = vst.msk [vmem:[%s359 + $0x68] sm:$0xff] %vm385, %v2412
      %2444 = vst.msk [vmem:[%s359 + $0x70] sm:$0xff] %vm385, %v2417
      %2445 = vst.msk [vmem:[%s359 + $0x78] sm:$0xff] %vm385, %v2422
      %vm2446 = vcmask 522240
      %2447 = vst.msk [vmem:[%s359 + $0x80] sm:$0x7f] %vm2446, %v2427
      %p2448 = scmp.lt.s32.totalorder %s21, 1
      %s2449 = scalar_select %p2448, %s21, 1
      %s2450 = smul.addr %s2449, 17
      %s2451 = smul.addr %s2450, 8
      %s2452 = scalar_lea.vmem %s10, %s2451
      // Predicated region
      $region61: #{channel_attention.1} parent=59 // pred_check
        %p2453 = pneg %p254
      $region62: #{channel_attention.1} parent=59 // pred_check_branch
        %2455 = sbr.rel (%p2453) target = $region64
      $region63: #{channel_attention.1} parent=59 // pred_region
        _
      $region64: #{channel_attention.1} parent=59 // pred_fallthru
        _
    $region60: #{channel_attention.1} parent=5 // pred_fallthru
      _
    %p2456 = scmp.le.s32.totalorder 2, %s16
    // Predicated region
    $region65: #{channel_attention.1} parent=5 // pred_check
      %p2457 = pneg %p2456
    $region66: #{channel_attention.1} parent=5 // pred_check_branch
      %2459 = sbr.rel (%p2457) target = $region68
    $region67: #{channel_attention.1} parent=5 // pred_region
      %s2460 = ssub.s32 %s16, 2
      // Predicated region
      $region69: #{channel_attention.1} parent=67 // pred_check
        %p2461 = pneg %p260
      $region70: #{channel_attention.1} parent=67 // pred_check_branch
        %2463 = sbr.rel (%p2461) target = $region72
      $region71: #{channel_attention.1} parent=67 // pred_region
        %p2464 = scmp.lt.s32.totalorder %s22, 1
        %s2465 = scalar_select %p2464, %s22, 1
        %s2466 = smul.addr %s2465, 17
        %s2467 = smul.addr %s2466, 8
        %s2468 = scalar_lea.vmem %s10, %s2467
      $region72: #{channel_attention.1} parent=67 // pred_fallthru
        _
    $region68: #{channel_attention.1} parent=5 // pred_fallthru
      _
  $region6: #{channel_attention.1} parent=0 // loop_footer
    %s20 = sadd.s32 1, %s16
  $region7: #{channel_attention.1} parent=0 // loop_footer_branch
    %15 = sbr.rel target = $region3
  $region8: #{channel_attention.1} parent=0 // loop_exit
    _

</llo_original>
